<compile_context>
chip_gen: v6e
topology: v6e:2x2x1
jax: 0.10.0
libtpu: 0.0.40
codegen_flags: <defaults>
</compile_context>

<pallas_src>
import jax
import jax.numpy as jnp
from jax.experimental import pallas as pl
from jax.experimental.pallas import tpu as pltpu


def _round_up(a, b):
    return (a + b - 1) // b * b


def _leaky_relu(x, slope=0.2):
    return jnp.where(x >= 0, x, slope * x)


def _choose_tile_n(N):
    """Batch-tile heuristic.

    Multiple of 16 (bf16 sublane packing), capped at 512 rows, dividing N
    exactly when possible (no batch padding and no [:N] slice pass over
    x_hat), and preferring >= 2 grid tiles so v7x's two TensorCores both get
    work via the "parallel" grid axis.
    """
    if N <= 16:
        return N                                 # single tile; block == full dim
    divisors = [t for t in range(16, min(512, N) + 1, 16) if N % t == 0]
    multi = [t for t in divisors if N // t >= 2]
    if multi:
        return max(multi)
    if divisors:
        return max(divisors)
    return min(512, _round_up(N, 16))            # pad only the last tile


def vae_gan_kernel(x_ref, eps_ref,
                   w1_ref, b1_ref,
                   wh_ref, bh_ref,
                   wg1_ref, bg1_ref,
                   wg2_ref, bg2_ref,
                   xhat_ref, kldrow_ref):
    # x arrives as f32 straight from HBM; cast to bf16 in-kernel (VPU cast is
    # hidden under DMA slack and removes a separate XLA cast pass over x).
    x = x_ref[...].astype(jnp.bfloat16)          # (TILE_N, D)
    eps = eps_ref[...]                           # (TILE_N, Lp) f32
    Lp = eps.shape[1]

    # ---------------- Encoder ----------------
    h = jnp.dot(x, w1_ref[...], preferred_element_type=jnp.float32) + b1_ref[...]
    h = _leaky_relu(h)

    # Fused mu / logvar heads: one (hidden, 2*Lp) matmul, sliced on a 128-lane
    # boundary.
    heads = jnp.dot(h.astype(jnp.bfloat16), wh_ref[...],
                    preferred_element_type=jnp.float32) + bh_ref[...]
    mu = heads[:, :Lp]                           # (TILE_N, Lp) f32
    logvar = heads[:, Lp:]                       # (TILE_N, Lp) f32

    # Reparameterization (f32).  One EUP exp; reuse std*std as exp(logvar).
    std = jnp.exp(0.5 * logvar)
    z = mu + eps * std                           # padded lanes: eps=0, mu=0 -> 0

    # Per-sample KLD (padded lanes: 1 + 0 - 0 - 1 = 0, so no masking needed).
    elem = 1.0 + logvar - mu * mu - std * std
    kldrow_ref[...] = -0.5 * jnp.sum(elem, axis=-1, keepdims=True)  # (TILE_N, 1)

    # ---------------- Generator ----------------
    g = jnp.dot(z.astype(jnp.bfloat16), wg1_ref[...],
                preferred_element_type=jnp.float32) + bg1_ref[...]
    g = _leaky_relu(g)
    xh = jnp.dot(g.astype(jnp.bfloat16), wg2_ref[...],
                 preferred_element_type=jnp.float32) + bg2_ref[...]
    xhat_ref[...] = jnp.tanh(xh)


def vae_gan_forward(x, eps, params):
    """x: (N, C, H, W) float32, eps: (N, L) float32 -> (x_hat, kld)."""
    N, C, H, W = x.shape
    D = C * H * W
    L = eps.shape[1]

    w1, b1, wmu, bmu, wlv, blv, wg1, bg1, wg2, bg2 = params
    hidden = w1.shape[1]

    TILE_N = _choose_tile_n(N)
    N_pad = _round_up(N, TILE_N)
    Lp = max(128, _round_up(L, 128))
    num_tiles = N_pad // TILE_N

    # ---- one-time layout plumbing (no cast/pad pass over x when TILE_N | N) ----
    x_flat = x.reshape(N, D)                     # stays f32; cast in-kernel
    if N_pad != N:
        x_flat = jnp.pad(x_flat, ((0, N_pad - N), (0, 0)))
    eps_p = jnp.pad(eps.astype(jnp.float32), ((0, N_pad - N), (0, Lp - L)))

    def pad_cols(w, cols):
        return jnp.pad(w, ((0, 0), (0, cols - w.shape[1])))

    w_heads = jnp.concatenate([pad_cols(wmu, Lp), pad_cols(wlv, Lp)],
                              axis=1).astype(jnp.bfloat16)        # (hidden, 2*Lp)
    b_heads = jnp.concatenate([pad_cols(bmu, Lp), pad_cols(blv, Lp)],
                              axis=1).astype(jnp.float32)         # (1, 2*Lp)
    wg1_p = jnp.pad(wg1, ((0, Lp - L), (0, 0))).astype(jnp.bfloat16)  # (Lp, hidden)

    inputs = (x_flat, eps_p,
              w1.astype(jnp.bfloat16), b1.astype(jnp.float32),
              w_heads, b_heads,
              wg1_p, bg1.astype(jnp.float32),
              wg2.astype(jnp.bfloat16), bg2.astype(jnp.float32))

    # Batch-tiled tensors are partitioned by the grid; weights/biases use a
    # constant index_map so they are DMA'd once and stay VMEM-resident.
    in_specs = [
        pl.BlockSpec((TILE_N, D), lambda i: (i, 0)),    # x (f32)
        pl.BlockSpec((TILE_N, Lp), lambda i: (i, 0)),   # eps (f32)
    ] + [pl.BlockSpec(a.shape, lambda i: (0, 0)) for a in inputs[2:]]

    out_shape = (
        jax.ShapeDtypeStruct((N_pad, D), jnp.float32),  # x_hat (flattened)
        jax.ShapeDtypeStruct((N_pad, 1), jnp.float32),  # per-row KLD sums
    )
    out_specs = [
        pl.BlockSpec((TILE_N, D), lambda i: (i, 0)),
        pl.BlockSpec((TILE_N, 1), lambda i: (i, 0)),
    ]

    # Scheduler hint.
    flops = 2 * N_pad * (D * hidden + hidden * 2 * Lp + Lp * hidden + hidden * D)
    transcendentals = N_pad * (Lp + D)
    bytes_accessed = int(
        sum(int(a.size) * a.dtype.itemsize for a in inputs)
        + N_pad * D * 4 + N_pad * 4)
    cost = pl.CostEstimate(flops=flops, transcendentals=transcendentals,
                           bytes_accessed=bytes_accessed)

    # VMEM budget: resident weights (double-buffered by default) + batch tiles
    # (double-buffered), 2x headroom, clamped to 75% of this generation's
    # physical VMEM (128 MiB on v5e/v6e, 64 MiB on v7x).
    try:
        vmem_cap = int(pltpu.get_tpu_info().vmem_capacity_bytes)
    except Exception:
        vmem_cap = 64 << 20                     # conservative (v7x) fallback
    weight_bytes = sum(int(a.size) * a.dtype.itemsize for a in inputs[2:])
    tile_bytes = TILE_N * (D * 4 + Lp * 4 + D * 4 + 128 * 4)
    need = 2 * (weight_bytes + tile_bytes)
    vmem_limit = int(min(max(2 * need, 32 << 20), (vmem_cap * 3) // 4))

    xhat_flat, kld_rows = pl.pallas_call(
        vae_gan_kernel,
        grid_spec=pltpu.PrefetchScalarGridSpec(
            num_scalar_prefetch=0,
            grid=(num_tiles,),
            in_specs=in_specs,
            out_specs=out_specs,
        ),
        out_shape=out_shape,
        compiler_params=pltpu.CompilerParams(
            dimension_semantics=("parallel",),
            vmem_limit_bytes=vmem_limit),
        cost_estimate=cost,
    )(*inputs)

    if N_pad != N:                               # only when no exact tiling exists
        xhat_flat = xhat_flat[:N]
        kld_rows = kld_rows[:N]
    x_hat = xhat_flat.reshape(N, C, H, W)
    kld = jnp.mean(kld_rows[:, 0])
    return x_hat, kld


def init_params(key, D, hidden, latent):
    ks = jax.random.split(key, 10)
    s = 0.02
    w1 = s * jax.random.normal(ks[0], (D, hidden), jnp.float32)
    b1 = 0.01 * jax.random.normal(ks[5], (1, hidden), jnp.float32)
    wmu = s * jax.random.normal(ks[1], (hidden, latent), jnp.float32)
    bmu = 0.01 * jax.random.normal(ks[6], (1, latent), jnp.float32)
    wlv = s * jax.random.normal(ks[2], (hidden, latent), jnp.float32)
    blv = 0.01 * jax.random.normal(ks[7], (1, latent), jnp.float32)
    wg1 = s * jax.random.normal(ks[3], (latent, hidden), jnp.float32)
    bg1 = 0.01 * jax.random.normal(ks[8], (1, hidden), jnp.float32)
    wg2 = s * jax.random.normal(ks[4], (hidden, D), jnp.float32)
    bg2 = 0.01 * jax.random.normal(ks[9], (1, D), jnp.float32)
    return (w1, b1, wmu, bmu, wlv, blv, wg1, bg1, wg2, bg2)


def reference_forward(x, eps, params):
    """Pure-JAX f32 reference (same math as the kernel, unfused/unpadded)."""
    w1, b1, wmu, bmu, wlv, blv, wg1, bg1, wg2, bg2 = params
    N = x.shape[0]
    xf = x.reshape(N, -1)
    h = _leaky_relu(xf @ w1 + b1)
    mu = h @ wmu + bmu
    logvar = h @ wlv + blv
    z = mu + eps * jnp.exp(0.5 * logvar)
    kld = jnp.mean(-0.5 * jnp.sum(1.0 + logvar - mu * mu - jnp.exp(logvar),
                                  axis=-1))
    g = _leaky_relu(z @ wg1 + bg1)
    xh = jnp.tanh(g @ wg2 + bg2)
    return xh.reshape(x.shape), kld


if __name__ == "__main__":
    # Small deterministic example: batch=2, channels=4, 16x16 spatial,
    # latent_dim=32, hidden=128.
    N, C, H, W = 2, 4, 16, 16
    latent_dim = 32
    hidden = 128
    D = C * H * W

    key = jax.random.PRNGKey(0)
    kx, keps, kp = jax.random.split(key, 3)

    x = jax.random.normal(kx, (N, C, H, W), jnp.float32)
    # eps for the reparameterization trick (stochastic sampling stays outside
    # the kernel hot path).
    eps = jax.random.normal(keps, (N, latent_dim), jnp.float32)
    params = init_params(kp, D, hidden, latent_dim)

    x_hat, kld = vae_gan_forward(x, eps, params)
    jax.block_until_ready((x_hat, kld))

    assert x_hat.shape == (N, C, H, W)
    assert x_hat.dtype == jnp.float32
    assert kld.shape == ()
    assert bool(jnp.all(jnp.isfinite(x_hat))) and bool(jnp.isfinite(kld))

    # Loose numerical check vs. the f32 reference (kernel matmuls run in bf16).
    x_hat_ref, kld_ref = reference_forward(x, eps, params)
    assert float(jnp.max(jnp.abs(x_hat - x_hat_ref))) < 0.1
    assert float(jnp.abs(kld - kld_ref)) < 0.1

    print("KERNEL_OK")
</pallas_src>

<mosaic_0001>
module attributes {stable_mosaic.version = 11 : i64} {
  func.func @vae_gan_kernel(%arg0: i32, %arg1: memref<2x1024xf32, #tpu.memory_space<vmem>>, %arg2: memref<2x128xf32, #tpu.memory_space<vmem>>, %arg3: memref<1024x128xbf16, #tpu.memory_space<vmem>>, %arg4: memref<1x128xf32, #tpu.memory_space<vmem>>, %arg5: memref<128x256xbf16, #tpu.memory_space<vmem>>, %arg6: memref<1x256xf32, #tpu.memory_space<vmem>>, %arg7: memref<128x128xbf16, #tpu.memory_space<vmem>>, %arg8: memref<1x128xf32, #tpu.memory_space<vmem>>, %arg9: memref<128x1024xbf16, #tpu.memory_space<vmem>>, %arg10: memref<1x1024xf32, #tpu.memory_space<vmem>>, %arg11: memref<2x1024xf32, #tpu.memory_space<vmem>>, %arg12: memref<2x1xf32, #tpu.memory_space<vmem>>) attributes {dimension_semantics = [#tpu.dimension_semantics<parallel>], iteration_bounds = array<i64: 1>, scalar_prefetch = 0 : i64, scratch_operands = 0 : i64, tpu.core_type = #tpu.core_type<tc>, window_params = [{transform_indices = @transform_0, window_bounds = array<i64: 2, 1024>}, {transform_indices = @transform_1, window_bounds = array<i64: 2, 128>}, {pipeline_mode = #tpu.pipeline_mode<synchronous>, transform_indices = @transform_2, window_bounds = array<i64: 1024, 128>}, {pipeline_mode = #tpu.pipeline_mode<synchronous>, transform_indices = @transform_3, window_bounds = array<i64: 1, 128>}, {pipeline_mode = #tpu.pipeline_mode<synchronous>, transform_indices = @transform_4, window_bounds = array<i64: 128, 256>}, {pipeline_mode = #tpu.pipeline_mode<synchronous>, transform_indices = @transform_5, window_bounds = array<i64: 1, 256>}, {pipeline_mode = #tpu.pipeline_mode<synchronous>, transform_indices = @transform_6, window_bounds = array<i64: 128, 128>}, {pipeline_mode = #tpu.pipeline_mode<synchronous>, transform_indices = @transform_7, window_bounds = array<i64: 1, 128>}, {pipeline_mode = #tpu.pipeline_mode<synchronous>, transform_indices = @transform_8, window_bounds = array<i64: 128, 1024>}, {pipeline_mode = #tpu.pipeline_mode<synchronous>, transform_indices = @transform_9, window_bounds = array<i64: 1, 1024>}, {transform_indices = @transform_10, window_bounds = array<i64: 2, 1024>}, {transform_indices = @transform_11, window_bounds = array<i64: 2, 1>}]} {
    %c0 = arith.constant 0 : index
    %c0_0 = arith.constant 0 : index
    %0 = vector.load %arg1[%c0, %c0_0] : memref<2x1024xf32, #tpu.memory_space<vmem>>, vector<2x1024xf32>
    %1 = arith.truncf %0 : vector<2x1024xf32> to vector<2x1024xbf16>
    %c0_1 = arith.constant 0 : index
    %c0_2 = arith.constant 0 : index
    %2 = vector.load %arg2[%c0_1, %c0_2] : memref<2x128xf32, #tpu.memory_space<vmem>>, vector<2x128xf32>
    %c0_3 = arith.constant 0 : index
    %c0_4 = arith.constant 0 : index
    %3 = vector.load %arg3[%c0_3, %c0_4] : memref<1024x128xbf16, #tpu.memory_space<vmem>>, vector<1024x128xbf16>
    %cst = arith.constant dense<0.000000e+00> : vector<2x128xf32>
    %4 = tpu.matmul %1, %3, %cst {dimension_numbers = #tpu.dot_dimension_numbers<[1], [0], [0], [1], [0, 0, 1, 1], [], []>} : vector<2x1024xbf16>, vector<1024x128xbf16>, vector<2x128xf32> -> vector<2x128xf32>
    %c0_5 = arith.constant 0 : index
    %c0_6 = arith.constant 0 : index
    %5 = vector.load %arg4[%c0_5, %c0_6] : memref<1x128xf32, #tpu.memory_space<vmem>>, vector<1x128xf32>
    %6 = vector.broadcast %5 : vector<1x128xf32> to vector<2x128xf32>
    %7 = arith.addf %4, %6 : vector<2x128xf32>
    %cst_7 = arith.constant 0.000000e+00 : f32
    %8 = vector.broadcast %cst_7 : f32 to vector<2x128xf32>
    %9 = arith.cmpf oge, %7, %8 : vector<2x128xf32>
    %cst_8 = arith.constant 2.000000e-01 : f32
    %10 = vector.broadcast %cst_8 : f32 to vector<2x128xf32>
    %11 = arith.mulf %10, %7 : vector<2x128xf32>
    %12 = arith.select %9, %7, %11 : vector<2x128xi1>, vector<2x128xf32>
    %13 = arith.truncf %12 : vector<2x128xf32> to vector<2x128xbf16>
    %c0_9 = arith.constant 0 : index
    %c0_10 = arith.constant 0 : index
    %14 = vector.load %arg5[%c0_9, %c0_10] : memref<128x256xbf16, #tpu.memory_space<vmem>>, vector<128x256xbf16>
    %cst_11 = arith.constant dense<0.000000e+00> : vector<2x256xf32>
    %15 = tpu.matmul %13, %14, %cst_11 {dimension_numbers = #tpu.dot_dimension_numbers<[1], [0], [0], [1], [0, 0, 1, 1], [], []>} : vector<2x128xbf16>, vector<128x256xbf16>, vector<2x256xf32> -> vector<2x256xf32>
    %c0_12 = arith.constant 0 : index
    %c0_13 = arith.constant 0 : index
    %16 = vector.load %arg6[%c0_12, %c0_13] : memref<1x256xf32, #tpu.memory_space<vmem>>, vector<1x256xf32>
    %17 = vector.broadcast %16 : vector<1x256xf32> to vector<2x256xf32>
    %18 = arith.addf %15, %17 : vector<2x256xf32>
    %19 = vector.extract_strided_slice %18 {offsets = [0, 0], sizes = [2, 128], strides = [1, 1]} : vector<2x256xf32> to vector<2x128xf32>
    %20 = vector.extract_strided_slice %18 {offsets = [0, 128], sizes = [2, 128], strides = [1, 1]} : vector<2x256xf32> to vector<2x128xf32>
    %cst_14 = arith.constant 5.000000e-01 : f32
    %21 = vector.broadcast %cst_14 : f32 to vector<2x128xf32>
    %22 = arith.mulf %21, %20 : vector<2x128xf32>
    %23 = math.exp %22 : vector<2x128xf32>
    %24 = arith.mulf %2, %23 : vector<2x128xf32>
    %25 = arith.addf %19, %24 : vector<2x128xf32>
    %cst_15 = arith.constant 1.000000e+00 : f32
    %26 = vector.broadcast %cst_15 : f32 to vector<2x128xf32>
    %27 = arith.addf %26, %20 : vector<2x128xf32>
    %28 = arith.mulf %19, %19 : vector<2x128xf32>
    %29 = arith.subf %27, %28 : vector<2x128xf32>
    %30 = arith.mulf %23, %23 : vector<2x128xf32>
    %31 = arith.subf %29, %30 : vector<2x128xf32>
    %cst_16 = arith.constant dense<0.000000e+00> : vector<2xf32>
    %32 = vector.multi_reduction <add>, %31, %cst_16 [1] : vector<2x128xf32> to vector<2xf32>
    %33 = vector.shape_cast %32 : vector<2xf32> to vector<2x1xf32>
    %cst_17 = arith.constant -5.000000e-01 : f32
    %34 = vector.broadcast %cst_17 : f32 to vector<2x1xf32>
    %35 = arith.mulf %34, %33 : vector<2x1xf32>
    %c0_18 = arith.constant 0 : index
    %c0_19 = arith.constant 0 : index
    %36 = vector.load %arg12[%c0_18, %c0_19] : memref<2x1xf32, #tpu.memory_space<vmem>>, vector<2x1xf32>
    tpu.vector_store %arg12[%c0_18, %c0_19], %35 {strides = array<i32>} : memref<2x1xf32, #tpu.memory_space<vmem>>, vector<2x1xf32>,
    %37 = arith.truncf %25 : vector<2x128xf32> to vector<2x128xbf16>
    %c0_20 = arith.constant 0 : index
    %c0_21 = arith.constant 0 : index
    %38 = vector.load %arg7[%c0_20, %c0_21] : memref<128x128xbf16, #tpu.memory_space<vmem>>, vector<128x128xbf16>
    %cst_22 = arith.constant dense<0.000000e+00> : vector<2x128xf32>
    %39 = tpu.matmul %37, %38, %cst_22 {dimension_numbers = #tpu.dot_dimension_numbers<[1], [0], [0], [1], [0, 0, 1, 1], [], []>} : vector<2x128xbf16>, vector<128x128xbf16>, vector<2x128xf32> -> vector<2x128xf32>
    %c0_23 = arith.constant 0 : index
    %c0_24 = arith.constant 0 : index
    %40 = vector.load %arg8[%c0_23, %c0_24] : memref<1x128xf32, #tpu.memory_space<vmem>>, vector<1x128xf32>
    %41 = vector.broadcast %40 : vector<1x128xf32> to vector<2x128xf32>
    %42 = arith.addf %39, %41 : vector<2x128xf32>
    %cst_25 = arith.constant 0.000000e+00 : f32
    %43 = vector.broadcast %cst_25 : f32 to vector<2x128xf32>
    %44 = arith.cmpf oge, %42, %43 : vector<2x128xf32>
    %cst_26 = arith.constant 2.000000e-01 : f32
    %45 = vector.broadcast %cst_26 : f32 to vector<2x128xf32>
    %46 = arith.mulf %45, %42 : vector<2x128xf32>
    %47 = arith.select %44, %42, %46 : vector<2x128xi1>, vector<2x128xf32>
    %48 = arith.truncf %47 : vector<2x128xf32> to vector<2x128xbf16>
    %c0_27 = arith.constant 0 : index
    %c0_28 = arith.constant 0 : index
    %49 = vector.load %arg9[%c0_27, %c0_28] : memref<128x1024xbf16, #tpu.memory_space<vmem>>, vector<128x1024xbf16>
    %cst_29 = arith.constant dense<0.000000e+00> : vector<2x1024xf32>
    %50 = tpu.matmul %48, %49, %cst_29 {dimension_numbers = #tpu.dot_dimension_numbers<[1], [0], [0], [1], [0, 0, 1, 1], [], []>} : vector<2x128xbf16>, vector<128x1024xbf16>, vector<2x1024xf32> -> vector<2x1024xf32>
    %c0_30 = arith.constant 0 : index
    %c0_31 = arith.constant 0 : index
    %51 = vector.load %arg10[%c0_30, %c0_31] : memref<1x1024xf32, #tpu.memory_space<vmem>>, vector<1x1024xf32>
    %52 = vector.broadcast %51 : vector<1x1024xf32> to vector<2x1024xf32>
    %53 = arith.addf %50, %52 : vector<2x1024xf32>
    %54 = math.tanh %53 : vector<2x1024xf32>
    %c0_32 = arith.constant 0 : index
    %c0_33 = arith.constant 0 : index
    %55 = vector.load %arg11[%c0_32, %c0_33] : memref<2x1024xf32, #tpu.memory_space<vmem>>, vector<2x1024xf32>
    tpu.vector_store %arg11[%c0_32, %c0_33], %54 {strides = array<i32>} : memref<2x1024xf32, #tpu.memory_space<vmem>>, vector<2x1024xf32>,
    return
  }
  func.func @transform_0(%arg0: i32) -> (i32, i32) {
    %c0_i32 = arith.constant 0 : i32
    %c0_i32_0 = arith.constant 0 : i32
    return %arg0, %c0_i32 : i32, i32
  }
  func.func @transform_1(%arg0: i32) -> (i32, i32) {
    %c0_i32 = arith.constant 0 : i32
    %c0_i32_0 = arith.constant 0 : i32
    return %arg0, %c0_i32 : i32, i32
  }
  func.func @transform_2(%arg0: i32) -> (i32, i32) {
    %c0_i32 = arith.constant 0 : i32
    %c0_i32_0 = arith.constant 0 : i32
    %c0_i32_1 = arith.constant 0 : i32
    return %c0_i32, %c0_i32_0 : i32, i32
  }
  func.func @transform_3(%arg0: i32) -> (i32, i32) {
    %c0_i32 = arith.constant 0 : i32
    %c0_i32_0 = arith.constant 0 : i32
    %c0_i32_1 = arith.constant 0 : i32
    return %c0_i32, %c0_i32_0 : i32, i32
  }
  func.func @transform_4(%arg0: i32) -> (i32, i32) {
    %c0_i32 = arith.constant 0 : i32
    %c0_i32_0 = arith.constant 0 : i32
    %c0_i32_1 = arith.constant 0 : i32
    return %c0_i32, %c0_i32_0 : i32, i32
  }
  func.func @transform_5(%arg0: i32) -> (i32, i32) {
    %c0_i32 = arith.constant 0 : i32
    %c0_i32_0 = arith.constant 0 : i32
    %c0_i32_1 = arith.constant 0 : i32
    return %c0_i32, %c0_i32_0 : i32, i32
  }
  func.func @transform_6(%arg0: i32) -> (i32, i32) {
    %c0_i32 = arith.constant 0 : i32
    %c0_i32_0 = arith.constant 0 : i32
    %c0_i32_1 = arith.constant 0 : i32
    return %c0_i32, %c0_i32_0 : i32, i32
  }
  func.func @transform_7(%arg0: i32) -> (i32, i32) {
    %c0_i32 = arith.constant 0 : i32
    %c0_i32_0 = arith.constant 0 : i32
    %c0_i32_1 = arith.constant 0 : i32
    return %c0_i32, %c0_i32_0 : i32, i32
  }
  func.func @transform_8(%arg0: i32) -> (i32, i32) {
    %c0_i32 = arith.constant 0 : i32
    %c0_i32_0 = arith.constant 0 : i32
    %c0_i32_1 = arith.constant 0 : i32
    return %c0_i32, %c0_i32_0 : i32, i32
  }
  func.func @transform_9(%arg0: i32) -> (i32, i32) {
    %c0_i32 = arith.constant 0 : i32
    %c0_i32_0 = arith.constant 0 : i32
    %c0_i32_1 = arith.constant 0 : i32
    return %c0_i32, %c0_i32_0 : i32, i32
  }
  func.func @transform_10(%arg0: i32) -> (i32, i32) {
    %c0_i32 = arith.constant 0 : i32
    %c0_i32_0 = arith.constant 0 : i32
    return %arg0, %c0_i32 : i32, i32
  }
  func.func @transform_11(%arg0: i32) -> (i32, i32) {
    %c0_i32 = arith.constant 0 : i32
    %c0_i32_0 = arith.constant 0 : i32
    return %arg0, %c0_i32 : i32, i32
  }
}

</mosaic_0001>

<llo_original>
// kernel: tpu_custom_call.1
$region0: #{tpu_custom_call.1}
  #allocation0 [shape = 'u32[]', space=smem, size = 0x4, offset = 0x4, fixed_abs, tag = 'smem constant byte address 0x4 - core index']
  #allocation1 [shape = 'u32[144,128]{1,0:T(1,128)}', space=vmem, size = 0x12000, scoped, tag = 'internal scratch']
  %s0 = inlined_call_operand.hbm [shape: f32[2,1024], index: 0, kind: input, shape index: {}]
  %s1 = inlined_call_operand.hbm [shape: f32[2,128], index: 1, kind: input, shape index: {}]
  %s2 = inlined_call_operand.hbm [shape: bf16[1024,128], index: 2, kind: input, shape index: {}]
  %s3 = inlined_call_operand.vmem [shape: f32[1,128], index: 3, kind: input, shape index: {}]
  %s4 = inlined_call_operand.hbm [shape: bf16[128,256], index: 4, kind: input, shape index: {}]
  %s5 = inlined_call_operand.vmem [shape: f32[1,256], index: 5, kind: input, shape index: {}]
  %s6 = inlined_call_operand.hbm [shape: bf16[128,128], index: 6, kind: input, shape index: {}]
  %s7 = inlined_call_operand.vmem [shape: f32[1,128], index: 7, kind: input, shape index: {}]
  %s8 = inlined_call_operand.hbm [shape: bf16[128,1024], index: 8, kind: input, shape index: {}]
  %s9 = inlined_call_operand.vmem [shape: f32[1,1024], index: 9, kind: input, shape index: {}]
  %s10 = inlined_call_operand.hbm [shape: f32[2,1024], index: 10, kind: output, shape index: {0}]
  %s11 = inlined_call_operand.vmem [shape: f32[2,1], index: 11, kind: output, shape index: {1}]
  %12 = xla_tuple %s10, %s11
  %s13 = sld [smem:[#allocation0]]
  $region82: #{tpu_custom_call.1} parent=0
    _
  %s15 = ssub.s32 1, %s13
  %s16 = scalar_select 0, %s15, %s13
  $region1: #{tpu_custom_call.1} parent=0
    #allocation2 [shape = 'u8[8192]{0}', space=vmem, size = 0x2000, scoped, tag = 'input window, operand 0, single buffered']
    #allocation3 [shape = 's32[1]{0}', space=sflag, size = 0x4, scoped, tag = 'scoped memory for tpu_custom_call.1']
    #allocation4 [shape = 's32[1]{0}', space=sflag, size = 0x4, scoped, tag = 'scoped memory for tpu_custom_call.1']
    #allocation5 [shape = 'u8[1024]{0}', space=vmem, size = 0x400, scoped, tag = 'input window, operand 1, single buffered']
    #allocation6 [shape = 's32[1]{0}', space=sflag, size = 0x4, scoped, tag = 'scoped memory for tpu_custom_call.1']
    #allocation7 [shape = 'u8[262144]{0}', space=vmem, size = 0x40000, scoped, tag = 'input window, operand 2, single buffered']
    #allocation8 [shape = 'u8[65536]{0}', space=vmem, size = 0x10000, scoped, tag = 'input window, operand 4, single buffered']
    #allocation9 [shape = 's32[1]{0}', space=sflag, size = 0x4, scoped, tag = 'scoped memory for tpu_custom_call.1']
    #allocation10 [shape = 'u8[32768]{0}', space=vmem, size = 0x8000, scoped, tag = 'input window, operand 6, single buffered']
    #allocation11 [shape = 'u8[262144]{0}', space=vmem, size = 0x40000, scoped, tag = 'input window, operand 8, single buffered']
    #allocation12 [shape = 's32[1]{0}', space=sflag, size = 0x4, scoped, tag = 'scoped memory for tpu_custom_call.1']
    #allocation13 [shape = 'u8[8192]{0}', space=vmem, size = 0x2000, scoped, tag = 'output window, operand 0, single buffered']
    %17 = vsyncpa [#allocation3], 0
    %18 = vsyncpa [#allocation6], 0
    %19 = vsyncpa [#allocation9], 0
    %20 = vsyncpa [#allocation12], 0
    %21 = vsyncpa [#allocation4], 0
    // Predicated region
    $region2: #{tpu_custom_call.1} parent=1 // pred_check
      _
    $region3: #{tpu_custom_call.1} parent=1 // pred_check_branch
      %23 = sbr.rel (0) target = $region5
    $region4: #{tpu_custom_call.1} parent=1 // pred_region
      %s25 = ssub.s32 256, 256
      %26 = vsyncadd [#allocation3], %s25
      %s28 = sshll.u32 [#allocation2], 4
      %s29 = int_to_ptr.vmem [resolvable:$true] %s28
      %31 = dma.hbm_to_vmem [thread:$0]  %s0, 256, %s29, [#allocation3]
    $region5: #{tpu_custom_call.1} parent=1 // pred_fallthru
      _
    // Predicated region
    $region6: #{tpu_custom_call.1} parent=1 // pred_check
      _
    $region7: #{tpu_custom_call.1} parent=1 // pred_check_branch
      %33 = sbr.rel (0) target = $region9
    $region8: #{tpu_custom_call.1} parent=1 // pred_region
      %s35 = ssub.s32 32, 32
      %36 = vsyncadd [#allocation6], %s35
      %s38 = sshll.u32 [#allocation5], 4
      %s39 = int_to_ptr.vmem [resolvable:$true] %s38
      %41 = dma.hbm_to_vmem [thread:$0]  %s1, 32, %s39, [#allocation6]
    $region9: #{tpu_custom_call.1} parent=1 // pred_fallthru
      _
    // Predicated region
    $region10: #{tpu_custom_call.1} parent=1 // pred_check
      _
    $region11: #{tpu_custom_call.1} parent=1 // pred_check_branch
      %43 = sbr.rel (0) target = $region13
    $region12: #{tpu_custom_call.1} parent=1 // pred_region
      %s45 = ssub.s32 8192, 8192
      %46 = vsyncadd [#allocation6], %s45
      %s47 = sshll.u32 [#allocation7], 4
      %s48 = int_to_ptr.vmem [resolvable:$true] %s47
      %53 = dma.hbm_to_vmem [thread:$0]  %s2, 8192, %s48, [#allocation6], 64, 64, 4
    $region13: #{tpu_custom_call.1} parent=1 // pred_fallthru
      _
    // Predicated region
    $region14: #{tpu_custom_call.1} parent=1 // pred_check
      _
    $region15: #{tpu_custom_call.1} parent=1 // pred_check_branch
      %55 = sbr.rel (0) target = $region17
    $region16: #{tpu_custom_call.1} parent=1 // pred_region
      _
    $region17: #{tpu_custom_call.1} parent=1 // pred_fallthru
      _
    // Predicated region
    $region18: #{tpu_custom_call.1} parent=1 // pred_check
      _
    $region19: #{tpu_custom_call.1} parent=1 // pred_check_branch
      %57 = sbr.rel (0) target = $region21
    $region20: #{tpu_custom_call.1} parent=1 // pred_region
      %s59 = ssub.s32 2048, 2048
      %60 = vsyncadd [#allocation9], %s59
      %s61 = sshll.u32 [#allocation8], 4
      %s62 = int_to_ptr.vmem [resolvable:$true] %s61
      %67 = dma.hbm_to_vmem [thread:$0]  %s4, 2048, %s62, [#allocation9], 128, 128, 8
    $region21: #{tpu_custom_call.1} parent=1 // pred_fallthru
      _
    // Predicated region
    $region22: #{tpu_custom_call.1} parent=1 // pred_check
      _
    $region23: #{tpu_custom_call.1} parent=1 // pred_check_branch
      %69 = sbr.rel (0) target = $region25
    $region24: #{tpu_custom_call.1} parent=1 // pred_region
      _
    $region25: #{tpu_custom_call.1} parent=1 // pred_fallthru
      _
    // Predicated region
    $region26: #{tpu_custom_call.1} parent=1 // pred_check
      _
    $region27: #{tpu_custom_call.1} parent=1 // pred_check_branch
      %71 = sbr.rel (0) target = $region29
    $region28: #{tpu_custom_call.1} parent=1 // pred_region
      %s73 = ssub.s32 1024, 1024
      %74 = vsyncadd [#allocation9], %s73
      %s75 = sshll.u32 [#allocation10], 4
      %s76 = int_to_ptr.vmem [resolvable:$true] %s75
      %81 = dma.hbm_to_vmem [thread:$0]  %s6, 1024, %s76, [#allocation9], 64, 64, 4
    $region29: #{tpu_custom_call.1} parent=1 // pred_fallthru
      _
    // Predicated region
    $region30: #{tpu_custom_call.1} parent=1 // pred_check
      _
    $region31: #{tpu_custom_call.1} parent=1 // pred_check_branch
      %83 = sbr.rel (0) target = $region33
    $region32: #{tpu_custom_call.1} parent=1 // pred_region
      _
    $region33: #{tpu_custom_call.1} parent=1 // pred_fallthru
      _
    // Predicated region
    $region34: #{tpu_custom_call.1} parent=1 // pred_check
      _
    $region35: #{tpu_custom_call.1} parent=1 // pred_check_branch
      %85 = sbr.rel (0) target = $region37
    $region36: #{tpu_custom_call.1} parent=1 // pred_region
      %s87 = ssub.s32 8192, 8192
      %88 = vsyncadd [#allocation12], %s87
      %s89 = sshll.u32 [#allocation11], 4
      %s90 = int_to_ptr.vmem [resolvable:$true] %s89
      %95 = dma.hbm_to_vmem [thread:$0]  %s8, 8192, %s90, [#allocation12], 512, 512, 32
    $region37: #{tpu_custom_call.1} parent=1 // pred_fallthru
      _
    // Predicated region
    $region38: #{tpu_custom_call.1} parent=1 // pred_check
      _
    $region39: #{tpu_custom_call.1} parent=1 // pred_check_branch
      %97 = sbr.rel (0) target = $region41
    $region40: #{tpu_custom_call.1} parent=1 // pred_region
      _
    $region41: #{tpu_custom_call.1} parent=1 // pred_fallthru
      _
    // Predicated region
    $region42: #{tpu_custom_call.1} parent=1 // pred_check
      _
    $region43: #{tpu_custom_call.1} parent=1 // pred_check_branch
      %99 = sbr.rel (0) target = $region45
    $region44: #{tpu_custom_call.1} parent=1 // pred_region
      %100 = dma.done [#allocation3], 256
    $region45: #{tpu_custom_call.1} parent=1 // pred_fallthru
      _
    // Predicated region
    $region46: #{tpu_custom_call.1} parent=1 // pred_check
      _
    $region47: #{tpu_custom_call.1} parent=1 // pred_check_branch
      %102 = sbr.rel (0) target = $region49
    $region48: #{tpu_custom_call.1} parent=1 // pred_region
      %103 = dma.done [#allocation6], 32
    $region49: #{tpu_custom_call.1} parent=1 // pred_fallthru
      _
    // Predicated region
    $region50: #{tpu_custom_call.1} parent=1 // pred_check
      _
    $region51: #{tpu_custom_call.1} parent=1 // pred_check_branch
      %105 = sbr.rel (0) target = $region53
    $region52: #{tpu_custom_call.1} parent=1 // pred_region
      %106 = dma.done [#allocation6], 8192
    $region53: #{tpu_custom_call.1} parent=1 // pred_fallthru
      _
    // Predicated region
    $region54: #{tpu_custom_call.1} parent=1 // pred_check
      _
    $region55: #{tpu_custom_call.1} parent=1 // pred_check_branch
      %108 = sbr.rel (0) target = $region57
    $region56: #{tpu_custom_call.1} parent=1 // pred_region
      %109 = dma.done [#allocation9], 2048
    $region57: #{tpu_custom_call.1} parent=1 // pred_fallthru
      _
    // Predicated region
    $region58: #{tpu_custom_call.1} parent=1 // pred_check
      _
    $region59: #{tpu_custom_call.1} parent=1 // pred_check_branch
      %111 = sbr.rel (0) target = $region61
    $region60: #{tpu_custom_call.1} parent=1 // pred_region
      %112 = dma.done [#allocation9], 1024
    $region61: #{tpu_custom_call.1} parent=1 // pred_fallthru
      _
    // Predicated region
    $region62: #{tpu_custom_call.1} parent=1 // pred_check
      _
    $region63: #{tpu_custom_call.1} parent=1 // pred_check_branch
      %114 = sbr.rel (0) target = $region65
    $region64: #{tpu_custom_call.1} parent=1 // pred_region
      %115 = dma.done [#allocation12], 8192
    $region65: #{tpu_custom_call.1} parent=1 // pred_fallthru
      _
    %v117 = vld [vmem:[#allocation2] sm:$0xff]
    %v118 = vld [vmem:[#allocation2 + $0x8] sm:$0xff]
    %v121 = vcombine.high %v117, %v117
    %v123 = vunpack.c.l.s4 1983009808
    %v124 = vunpack.c.0.s8 %v123
    %v125 = vlaneseq
    %v126 = vshrl.u32 %v125, 7
    %v127 = vsub.s32 %v124, %v126
    %v128 = vrot.slane %v117, %v127
    %v130 = vunpack.c.l.s4 1983009808
    %v131 = vunpack.c.0.s8 %v130
    %v132 = vlaneseq
    %v133 = vshrl.u32 %v132, 7
    %v134 = vsub.s32 %v131, %v133
    %v135 = vrot.slane %v121, %v134
    %v136 = vcombine.high %v128, %v128
    %v137 = vcombine.high %v135, %v135
    %v138 = vcombine.high %v118, %v118
    %v140 = vunpack.c.l.s4 1983009808
    %v141 = vunpack.c.0.s8 %v140
    %v142 = vlaneseq
    %v143 = vshrl.u32 %v142, 7
    %v144 = vsub.s32 %v141, %v143
    %v145 = vrot.slane %v118, %v144
    %v147 = vunpack.c.l.s4 1983009808
    %v148 = vunpack.c.0.s8 %v147
    %v149 = vlaneseq
    %v150 = vshrl.u32 %v149, 7
    %v151 = vsub.s32 %v148, %v150
    %v152 = vrot.slane %v138, %v151
    %v153 = vcombine.high %v145, %v145
    %v154 = vcombine.high %v152, %v152
    %v163 = vpack.c.bf16 %v128, %v128
    %v164 = vpack.c.bf16 %v136, %v136
    %v165 = vpack.c.bf16 %v135, %v135
    %v166 = vpack.c.bf16 %v137, %v137
    %v167 = vpack.c.bf16 %v145, %v145
    %v168 = vpack.c.bf16 %v153, %v153
    %v169 = vpack.c.bf16 %v152, %v152
    %v170 = vpack.c.bf16 %v154, %v154
    %v171 = vld [vmem:[#allocation5] sm:$0x3]
    %v172 = vld [vmem:[#allocation7] sm:$0xf]
    %v173 = vld [vmem:[#allocation7 + $0x4] sm:$0xf]
    %v174 = vld [vmem:[#allocation7 + $0x8] sm:$0xf]
    %v175 = vld [vmem:[#allocation7 + $0xc] sm:$0xf]
    %v176 = vld [vmem:[#allocation7 + $0x10] sm:$0xf]
    %v177 = vld [vmem:[#allocation7 + $0x14] sm:$0xf]
    %v178 = vld [vmem:[#allocation7 + $0x18] sm:$0xf]
    %v179 = vld [vmem:[#allocation7 + $0x1c] sm:$0xf]
    %v180 = vld [vmem:[#allocation7 + $0x20] sm:$0xf]
    %v181 = vld [vmem:[#allocation7 + $0x24] sm:$0xf]
    %v182 = vld [vmem:[#allocation7 + $0x28] sm:$0xf]
    %v183 = vld [vmem:[#allocation7 + $0x2c] sm:$0xf]
    %v184 = vld [vmem:[#allocation7 + $0x30] sm:$0xf]
    %v185 = vld [vmem:[#allocation7 + $0x34] sm:$0xf]
    %v186 = vld [vmem:[#allocation7 + $0x38] sm:$0xf]
    %v187 = vld [vmem:[#allocation7 + $0x3c] sm:$0xf]
    %v188 = vld [vmem:[#allocation7 + $0x40] sm:$0xf]
    %v189 = vld [vmem:[#allocation7 + $0x44] sm:$0xf]
    %v190 = vld [vmem:[#allocation7 + $0x48] sm:$0xf]
    %v191 = vld [vmem:[#allocation7 + $0x4c] sm:$0xf]
    %v192 = vld [vmem:[#allocation7 + $0x50] sm:$0xf]
    %v193 = vld [vmem:[#allocation7 + $0x54] sm:$0xf]
    %v194 = vld [vmem:[#allocation7 + $0x58] sm:$0xf]
    %v195 = vld [vmem:[#allocation7 + $0x5c] sm:$0xf]
    %v196 = vld [vmem:[#allocation7 + $0x60] sm:$0xf]
    %v197 = vld [vmem:[#allocation7 + $0x64] sm:$0xf]
    %v198 = vld [vmem:[#allocation7 + $0x68] sm:$0xf]
    %v199 = vld [vmem:[#allocation7 + $0x6c] sm:$0xf]
    %v200 = vld [vmem:[#allocation7 + $0x70] sm:$0xf]
    %v201 = vld [vmem:[#allocation7 + $0x74] sm:$0xf]
    %v202 = vld [vmem:[#allocation7 + $0x78] sm:$0xf]
    %v203 = vld [vmem:[#allocation7 + $0x7c] sm:$0xf]
    %v204 = vld [vmem:[#allocation7 + $0x80] sm:$0xf]
    %v205 = vld [vmem:[#allocation7 + $0x84] sm:$0xf]
    %v206 = vld [vmem:[#allocation7 + $0x88] sm:$0xf]
    %v207 = vld [vmem:[#allocation7 + $0x8c] sm:$0xf]
    %v208 = vld [vmem:[#allocation7 + $0x90] sm:$0xf]
    %v209 = vld [vmem:[#allocation7 + $0x94] sm:$0xf]
    %v210 = vld [vmem:[#allocation7 + $0x98] sm:$0xf]
    %v211 = vld [vmem:[#allocation7 + $0x9c] sm:$0xf]
    %v212 = vld [vmem:[#allocation7 + $0xa0] sm:$0xf]
    %v213 = vld [vmem:[#allocation7 + $0xa4] sm:$0xf]
    %v214 = vld [vmem:[#allocation7 + $0xa8] sm:$0xf]
    %v215 = vld [vmem:[#allocation7 + $0xac] sm:$0xf]
    %v216 = vld [vmem:[#allocation7 + $0xb0] sm:$0xf]
    %v217 = vld [vmem:[#allocation7 + $0xb4] sm:$0xf]
    %v218 = vld [vmem:[#allocation7 + $0xb8] sm:$0xf]
    %v219 = vld [vmem:[#allocation7 + $0xbc] sm:$0xf]
    %v220 = vld [vmem:[#allocation7 + $0xc0] sm:$0xf]
    %v221 = vld [vmem:[#allocation7 + $0xc4] sm:$0xf]
    %v222 = vld [vmem:[#allocation7 + $0xc8] sm:$0xf]
    %v223 = vld [vmem:[#allocation7 + $0xcc] sm:$0xf]
    %v224 = vld [vmem:[#allocation7 + $0xd0] sm:$0xf]
    %v225 = vld [vmem:[#allocation7 + $0xd4] sm:$0xf]
    %v226 = vld [vmem:[#allocation7 + $0xd8] sm:$0xf]
    %v227 = vld [vmem:[#allocation7 + $0xdc] sm:$0xf]
    %v228 = vld [vmem:[#allocation7 + $0xe0] sm:$0xf]
    %v229 = vld [vmem:[#allocation7 + $0xe4] sm:$0xf]
    %v230 = vld [vmem:[#allocation7 + $0xe8] sm:$0xf]
    %v231 = vld [vmem:[#allocation7 + $0xec] sm:$0xf]
    %v232 = vld [vmem:[#allocation7 + $0xf0] sm:$0xf]
    %v233 = vld [vmem:[#allocation7 + $0xf4] sm:$0xf]
    %v234 = vld [vmem:[#allocation7 + $0xf8] sm:$0xf]
    %v235 = vld [vmem:[#allocation7 + $0xfc] sm:$0xf]
    %v236 = vld [vmem:[#allocation7 + $0x100] sm:$0xf]
    %v237 = vld [vmem:[#allocation7 + $0x104] sm:$0xf]
    %v238 = vld [vmem:[#allocation7 + $0x108] sm:$0xf]
    %v239 = vld [vmem:[#allocation7 + $0x10c] sm:$0xf]
    %v240 = vld [vmem:[#allocation7 + $0x110] sm:$0xf]
    %v241 = vld [vmem:[#allocation7 + $0x114] sm:$0xf]
    %v242 = vld [vmem:[#allocation7 + $0x118] sm:$0xf]
    %v243 = vld [vmem:[#allocation7 + $0x11c] sm:$0xf]
    %v244 = vld [vmem:[#allocation7 + $0x120] sm:$0xf]
    %v245 = vld [vmem:[#allocation7 + $0x124] sm:$0xf]
    %v246 = vld [vmem:[#allocation7 + $0x128] sm:$0xf]
    %v247 = vld [vmem:[#allocation7 + $0x12c] sm:$0xf]
    %v248 = vld [vmem:[#allocation7 + $0x130] sm:$0xf]
    %v249 = vld [vmem:[#allocation7 + $0x134] sm:$0xf]
    %v250 = vld [vmem:[#allocation7 + $0x138] sm:$0xf]
    %v251 = vld [vmem:[#allocation7 + $0x13c] sm:$0xf]
    %v252 = vld [vmem:[#allocation7 + $0x140] sm:$0xf]
    %v253 = vld [vmem:[#allocation7 + $0x144] sm:$0xf]
    %v254 = vld [vmem:[#allocation7 + $0x148] sm:$0xf]
    %v255 = vld [vmem:[#allocation7 + $0x14c] sm:$0xf]
    %v256 = vld [vmem:[#allocation7 + $0x150] sm:$0xf]
    %v257 = vld [vmem:[#allocation7 + $0x154] sm:$0xf]
    %v258 = vld [vmem:[#allocation7 + $0x158] sm:$0xf]
    %v259 = vld [vmem:[#allocation7 + $0x15c] sm:$0xf]
    %v260 = vld [vmem:[#allocation7 + $0x160] sm:$0xf]
    %v261 = vld [vmem:[#allocation7 + $0x164] sm:$0xf]
    %v262 = vld [vmem:[#allocation7 + $0x168] sm:$0xf]
    %v263 = vld [vmem:[#allocation7 + $0x16c] sm:$0xf]
    %v264 = vld [vmem:[#allocation7 + $0x170] sm:$0xf]
    %v265 = vld [vmem:[#allocation7 + $0x174] sm:$0xf]
    %v266 = vld [vmem:[#allocation7 + $0x178] sm:$0xf]
    %v267 = vld [vmem:[#allocation7 + $0x17c] sm:$0xf]
    %v268 = vld [vmem:[#allocation7 + $0x180] sm:$0xf]
    %v269 = vld [vmem:[#allocation7 + $0x184] sm:$0xf]
    %v270 = vld [vmem:[#allocation7 + $0x188] sm:$0xf]
    %v271 = vld [vmem:[#allocation7 + $0x18c] sm:$0xf]
    %v272 = vld [vmem:[#allocation7 + $0x190] sm:$0xf]
    %v273 = vld [vmem:[#allocation7 + $0x194] sm:$0xf]
    %v274 = vld [vmem:[#allocation7 + $0x198] sm:$0xf]
    %v275 = vld [vmem:[#allocation7 + $0x19c] sm:$0xf]
    %v276 = vld [vmem:[#allocation7 + $0x1a0] sm:$0xf]
    %v277 = vld [vmem:[#allocation7 + $0x1a4] sm:$0xf]
    %v278 = vld [vmem:[#allocation7 + $0x1a8] sm:$0xf]
    %v279 = vld [vmem:[#allocation7 + $0x1ac] sm:$0xf]
    %v280 = vld [vmem:[#allocation7 + $0x1b0] sm:$0xf]
    %v281 = vld [vmem:[#allocation7 + $0x1b4] sm:$0xf]
    %v282 = vld [vmem:[#allocation7 + $0x1b8] sm:$0xf]
    %v283 = vld [vmem:[#allocation7 + $0x1bc] sm:$0xf]
    %v284 = vld [vmem:[#allocation7 + $0x1c0] sm:$0xf]
    %v285 = vld [vmem:[#allocation7 + $0x1c4] sm:$0xf]
    %v286 = vld [vmem:[#allocation7 + $0x1c8] sm:$0xf]
    %v287 = vld [vmem:[#allocation7 + $0x1cc] sm:$0xf]
    %v288 = vld [vmem:[#allocation7 + $0x1d0] sm:$0xf]
    %v289 = vld [vmem:[#allocation7 + $0x1d4] sm:$0xf]
    %v290 = vld [vmem:[#allocation7 + $0x1d8] sm:$0xf]
    %v291 = vld [vmem:[#allocation7 + $0x1dc] sm:$0xf]
    %v292 = vld [vmem:[#allocation7 + $0x1e0] sm:$0xf]
    %v293 = vld [vmem:[#allocation7 + $0x1e4] sm:$0xf]
    %v294 = vld [vmem:[#allocation7 + $0x1e8] sm:$0xf]
    %v295 = vld [vmem:[#allocation7 + $0x1ec] sm:$0xf]
    %v296 = vld [vmem:[#allocation7 + $0x1f0] sm:$0xf]
    %v297 = vld [vmem:[#allocation7 + $0x1f4] sm:$0xf]
    %v298 = vld [vmem:[#allocation7 + $0x1f8] sm:$0xf]
    %v299 = vld [vmem:[#allocation7 + $0x1fc] sm:$0xf]
    %v300 = vld [vmem:[%s3] sm:$0x1]
    %v302 = vlaneseq
    %v303 = vshrl.u32 %v302, 7
    %v304 = vsub.s32 0, %v303
    %v305 = vrot.slane %v300, %v304
    %v435 = vunpack.c.l.b16 %v172
    %v436 = vunpack.c.l.b16 %v173
    %v437 = vunpack.c.l.b16 %v174
    %v438 = vunpack.c.l.b16 %v175
    %v439 = vunpack.c.l.b16 %v176
    %v440 = vunpack.c.l.b16 %v177
    %v441 = vunpack.c.l.b16 %v178
    %v442 = vunpack.c.l.b16 %v179
    %v443 = vunpack.c.l.b16 %v180
    %v444 = vunpack.c.l.b16 %v181
    %v445 = vunpack.c.l.b16 %v182
    %v446 = vunpack.c.l.b16 %v183
    %v447 = vunpack.c.l.b16 %v184
    %v448 = vunpack.c.l.b16 %v185
    %v449 = vunpack.c.l.b16 %v186
    %v450 = vunpack.c.l.b16 %v187
    %v451 = vunpack.c.l.b16 %v188
    %v452 = vunpack.c.l.b16 %v189
    %v453 = vunpack.c.l.b16 %v190
    %v454 = vunpack.c.l.b16 %v191
    %v455 = vunpack.c.l.b16 %v192
    %v456 = vunpack.c.l.b16 %v193
    %v457 = vunpack.c.l.b16 %v194
    %v458 = vunpack.c.l.b16 %v195
    %v459 = vunpack.c.l.b16 %v196
    %v460 = vunpack.c.l.b16 %v197
    %v461 = vunpack.c.l.b16 %v198
    %v462 = vunpack.c.l.b16 %v199
    %v463 = vunpack.c.l.b16 %v200
    %v464 = vunpack.c.l.b16 %v201
    %v465 = vunpack.c.l.b16 %v202
    %v466 = vunpack.c.l.b16 %v203
    %v467 = vunpack.c.l.b16 %v204
    %v468 = vunpack.c.l.b16 %v205
    %v469 = vunpack.c.l.b16 %v206
    %v470 = vunpack.c.l.b16 %v207
    %v471 = vunpack.c.l.b16 %v208
    %v472 = vunpack.c.l.b16 %v209
    %v473 = vunpack.c.l.b16 %v210
    %v474 = vunpack.c.l.b16 %v211
    %v475 = vunpack.c.l.b16 %v212
    %v476 = vunpack.c.l.b16 %v213
    %v477 = vunpack.c.l.b16 %v214
    %v478 = vunpack.c.l.b16 %v215
    %v479 = vunpack.c.l.b16 %v216
    %v480 = vunpack.c.l.b16 %v217
    %v481 = vunpack.c.l.b16 %v218
    %v482 = vunpack.c.l.b16 %v219
    %v483 = vunpack.c.l.b16 %v220
    %v484 = vunpack.c.l.b16 %v221
    %v485 = vunpack.c.l.b16 %v222
    %v486 = vunpack.c.l.b16 %v223
    %v487 = vunpack.c.l.b16 %v224
    %v488 = vunpack.c.l.b16 %v225
    %v489 = vunpack.c.l.b16 %v226
    %v490 = vunpack.c.l.b16 %v227
    %v491 = vunpack.c.l.b16 %v228
    %v492 = vunpack.c.l.b16 %v229
    %v493 = vunpack.c.l.b16 %v230
    %v494 = vunpack.c.l.b16 %v231
    %v495 = vunpack.c.l.b16 %v232
    %v496 = vunpack.c.l.b16 %v233
    %v497 = vunpack.c.l.b16 %v234
    %v498 = vunpack.c.l.b16 %v235
    %v499 = vunpack.c.l.b16 %v236
    %v500 = vunpack.c.l.b16 %v237
    %v501 = vunpack.c.l.b16 %v238
    %v502 = vunpack.c.l.b16 %v239
    %v503 = vunpack.c.l.b16 %v240
    %v504 = vunpack.c.l.b16 %v241
    %v505 = vunpack.c.l.b16 %v242
    %v506 = vunpack.c.l.b16 %v243
    %v507 = vunpack.c.l.b16 %v244
    %v508 = vunpack.c.l.b16 %v245
    %v509 = vunpack.c.l.b16 %v246
    %v510 = vunpack.c.l.b16 %v247
    %v511 = vunpack.c.l.b16 %v248
    %v512 = vunpack.c.l.b16 %v249
    %v513 = vunpack.c.l.b16 %v250
    %v514 = vunpack.c.l.b16 %v251
    %v515 = vunpack.c.l.b16 %v252
    %v516 = vunpack.c.l.b16 %v253
    %v517 = vunpack.c.l.b16 %v254
    %v518 = vunpack.c.l.b16 %v255
    %v519 = vunpack.c.l.b16 %v256
    %v520 = vunpack.c.l.b16 %v257
    %v521 = vunpack.c.l.b16 %v258
    %v522 = vunpack.c.l.b16 %v259
    %v523 = vunpack.c.l.b16 %v260
    %v524 = vunpack.c.l.b16 %v261
    %v525 = vunpack.c.l.b16 %v262
    %v526 = vunpack.c.l.b16 %v263
    %v527 = vunpack.c.l.b16 %v264
    %v528 = vunpack.c.l.b16 %v265
    %v529 = vunpack.c.l.b16 %v266
    %v530 = vunpack.c.l.b16 %v267
    %v531 = vunpack.c.l.b16 %v268
    %v532 = vunpack.c.l.b16 %v269
    %v533 = vunpack.c.l.b16 %v270
    %v534 = vunpack.c.l.b16 %v271
    %v535 = vunpack.c.l.b16 %v272
    %v536 = vunpack.c.l.b16 %v273
    %v537 = vunpack.c.l.b16 %v274
    %v538 = vunpack.c.l.b16 %v275
    %v539 = vunpack.c.l.b16 %v276
    %v540 = vunpack.c.l.b16 %v277
    %v541 = vunpack.c.l.b16 %v278
    %v542 = vunpack.c.l.b16 %v279
    %v543 = vunpack.c.l.b16 %v280
    %v544 = vunpack.c.l.b16 %v281
    %v545 = vunpack.c.l.b16 %v282
    %v546 = vunpack.c.l.b16 %v283
    %v547 = vunpack.c.l.b16 %v284
    %v548 = vunpack.c.l.b16 %v285
    %v549 = vunpack.c.l.b16 %v286
    %v550 = vunpack.c.l.b16 %v287
    %v551 = vunpack.c.l.b16 %v288
    %v552 = vunpack.c.l.b16 %v289
    %v553 = vunpack.c.l.b16 %v290
    %v554 = vunpack.c.l.b16 %v291
    %v555 = vunpack.c.l.b16 %v292
    %v556 = vunpack.c.l.b16 %v293
    %v557 = vunpack.c.l.b16 %v294
    %v558 = vunpack.c.l.b16 %v295
    %v559 = vunpack.c.l.b16 %v296
    %v560 = vunpack.c.l.b16 %v297
    %v561 = vunpack.c.l.b16 %v298
    %v562 = vunpack.c.l.b16 %v299
    %v563 = vpack.c.b16 %v436, %v435
    %v564 = vpack.c.b16 %v438, %v437
    %v565 = vpack.c.b16 %v440, %v439
    %v566 = vpack.c.b16 %v442, %v441
    %v567 = vpack.c.b16 %v444, %v443
    %v568 = vpack.c.b16 %v446, %v445
    %v569 = vpack.c.b16 %v448, %v447
    %v570 = vpack.c.b16 %v450, %v449
    %v571 = vpack.c.b16 %v452, %v451
    %v572 = vpack.c.b16 %v454, %v453
    %v573 = vpack.c.b16 %v456, %v455
    %v574 = vpack.c.b16 %v458, %v457
    %v575 = vpack.c.b16 %v460, %v459
    %v576 = vpack.c.b16 %v462, %v461
    %v577 = vpack.c.b16 %v464, %v463
    %v578 = vpack.c.b16 %v466, %v465
    %v579 = vpack.c.b16 %v468, %v467
    %v580 = vpack.c.b16 %v470, %v469
    %v581 = vpack.c.b16 %v472, %v471
    %v582 = vpack.c.b16 %v474, %v473
    %v583 = vpack.c.b16 %v476, %v475
    %v584 = vpack.c.b16 %v478, %v477
    %v585 = vpack.c.b16 %v480, %v479
    %v586 = vpack.c.b16 %v482, %v481
    %v587 = vpack.c.b16 %v484, %v483
    %v588 = vpack.c.b16 %v486, %v485
    %v589 = vpack.c.b16 %v488, %v487
    %v590 = vpack.c.b16 %v490, %v489
    %v591 = vpack.c.b16 %v492, %v491
    %v592 = vpack.c.b16 %v494, %v493
    %v593 = vpack.c.b16 %v496, %v495
    %v594 = vpack.c.b16 %v498, %v497
    %v595 = vpack.c.b16 %v500, %v499
    %v596 = vpack.c.b16 %v502, %v501
    %v597 = vpack.c.b16 %v504, %v503
    %v598 = vpack.c.b16 %v506, %v505
    %v599 = vpack.c.b16 %v508, %v507
    %v600 = vpack.c.b16 %v510, %v509
    %v601 = vpack.c.b16 %v512, %v511
    %v602 = vpack.c.b16 %v514, %v513
    %v603 = vpack.c.b16 %v516, %v515
    %v604 = vpack.c.b16 %v518, %v517
    %v605 = vpack.c.b16 %v520, %v519
    %v606 = vpack.c.b16 %v522, %v521
    %v607 = vpack.c.b16 %v524, %v523
    %v608 = vpack.c.b16 %v526, %v525
    %v609 = vpack.c.b16 %v528, %v527
    %v610 = vpack.c.b16 %v530, %v529
    %v611 = vpack.c.b16 %v532, %v531
    %v612 = vpack.c.b16 %v534, %v533
    %v613 = vpack.c.b16 %v536, %v535
    %v614 = vpack.c.b16 %v538, %v537
    %v615 = vpack.c.b16 %v540, %v539
    %v616 = vpack.c.b16 %v542, %v541
    %v617 = vpack.c.b16 %v544, %v543
    %v618 = vpack.c.b16 %v546, %v545
    %v619 = vpack.c.b16 %v548, %v547
    %v620 = vpack.c.b16 %v550, %v549
    %v621 = vpack.c.b16 %v552, %v551
    %v622 = vpack.c.b16 %v554, %v553
    %v623 = vpack.c.b16 %v556, %v555
    %v624 = vpack.c.b16 %v558, %v557
    %v625 = vpack.c.b16 %v560, %v559
    %v626 = vpack.c.b16 %v562, %v561
    %691 = vmatprep.subr.bf16.mxu0 0
    %692 = vmatpush1.bf16.msra.mxu0 %v570
    %693 = vmatprep.subr.bf16.mxu0 0
    %694 = vmatpush1.bf16.msra.mxu0 %v569
    %695 = vmatprep.subr.bf16.mxu0 0
    %696 = vmatpush1.bf16.msra.mxu0 %v568
    %697 = vmatprep.subr.bf16.mxu0 0
    %698 = vmatpush1.bf16.msra.mxu0 %v567
    %699 = vmatprep.subr.bf16.mxu0 0
    %700 = vmatpush1.bf16.msra.mxu0 %v566
    %701 = vmatprep.subr.bf16.mxu0 0
    %702 = vmatpush1.bf16.msra.mxu0 %v565
    %703 = vmatprep.subr.bf16.mxu0 0
    %704 = vmatpush1.bf16.msra.mxu0 %v564
    %705 = vmatprep.subr.bf16.mxu0 0
    %706 = vmatpush1.bf16.msra.mxu0 %v563
    %707 = vmatprep.subr.bf16.mxu0 0
    %708 = vmatpush2.bf16.msra.mxu0 %v578
    %709 = vmatprep.subr.bf16.mxu0 0
    %710 = vmatpush2.bf16.msra.mxu0 %v577
    %711 = vmatprep.subr.bf16.mxu0 0
    %712 = vmatpush2.bf16.msra.mxu0 %v576
    %713 = vmatprep.subr.bf16.mxu0 0
    %714 = vmatpush2.bf16.msra.mxu0 %v575
    %715 = vmatprep.subr.bf16.mxu0 0
    %716 = vmatpush2.bf16.msra.mxu0 %v574
    %717 = vmatprep.subr.bf16.mxu0 0
    %718 = vmatpush2.bf16.msra.mxu0 %v573
    %719 = vmatprep.subr.bf16.mxu0 0
    %720 = vmatpush2.bf16.msra.mxu0 %v572
    %721 = vmatprep.subr.bf16.mxu0 0
    %722 = vmatpush2.bf16.msra.mxu0 %v571
    %723 = vmatprep.mubr.bf16.mxu0 %v164
    %724 = vmatmul.mubr.bf16.gmra.mxu0 %v163
    %v725 = vpop.f32.mrf.mxu0
    %v726 = vadd.f32 %v305, %v725
    %v727 = vpop.f32.mrf.mxu0
    %v728 = vpop.f32.mrf.mxu0
    %v729 = vpop.f32.mrf.mxu0
    %730 = vdwg.mxu0
    %731 = vmatprep.subr.bf16.mxu0 0
    %732 = vmatpush1.bf16.msra.mxu0 %v586
    %733 = vmatprep.subr.bf16.mxu0 0
    %734 = vmatpush1.bf16.msra.mxu0 %v585
    %735 = vmatprep.subr.bf16.mxu0 0
    %736 = vmatpush1.bf16.msra.mxu0 %v584
    %737 = vmatprep.subr.bf16.mxu0 0
    %738 = vmatpush1.bf16.msra.mxu0 %v583
    %739 = vmatprep.subr.bf16.mxu0 0
    %740 = vmatpush1.bf16.msra.mxu0 %v582
    %741 = vmatprep.subr.bf16.mxu0 0
    %742 = vmatpush1.bf16.msra.mxu0 %v581
    %743 = vmatprep.subr.bf16.mxu0 0
    %744 = vmatpush1.bf16.msra.mxu0 %v580
    %745 = vmatprep.subr.bf16.mxu0 0
    %746 = vmatpush1.bf16.msra.mxu0 %v579
    %747 = vmatprep.subr.bf16.mxu0 0
    %748 = vmatpush2.bf16.msra.mxu0 %v594
    %749 = vmatprep.subr.bf16.mxu0 0
    %750 = vmatpush2.bf16.msra.mxu0 %v593
    %751 = vmatprep.subr.bf16.mxu0 0
    %752 = vmatpush2.bf16.msra.mxu0 %v592
    %753 = vmatprep.subr.bf16.mxu0 0
    %754 = vmatpush2.bf16.msra.mxu0 %v591
    %755 = vmatprep.subr.bf16.mxu0 0
    %756 = vmatpush2.bf16.msra.mxu0 %v590
    %757 = vmatprep.subr.bf16.mxu0 0
    %758 = vmatpush2.bf16.msra.mxu0 %v589
    %759 = vmatprep.subr.bf16.mxu0 0
    %760 = vmatpush2.bf16.msra.mxu0 %v588
    %761 = vmatprep.subr.bf16.mxu0 0
    %762 = vmatpush2.bf16.msra.mxu0 %v587
    %763 = vmatprep.mubr.bf16.mxu0 %v166
    %764 = vmatmul.mubr.bf16.gmra.mxu0 %v165
    %v765 = vpop.f32.mrf.mxu0
    %v766 = vadd.f32 %v726, %v765
    %v767 = vpop.f32.mrf.mxu0
    %v768 = vpop.f32.mrf.mxu0
    %v769 = vpop.f32.mrf.mxu0
    %770 = vdwg.mxu0
    %771 = vmatprep.subr.bf16.mxu0 0
    %772 = vmatpush1.bf16.msra.mxu0 %v602
    %773 = vmatprep.subr.bf16.mxu0 0
    %774 = vmatpush1.bf16.msra.mxu0 %v601
    %775 = vmatprep.subr.bf16.mxu0 0
    %776 = vmatpush1.bf16.msra.mxu0 %v600
    %777 = vmatprep.subr.bf16.mxu0 0
    %778 = vmatpush1.bf16.msra.mxu0 %v599
    %779 = vmatprep.subr.bf16.mxu0 0
    %780 = vmatpush1.bf16.msra.mxu0 %v598
    %781 = vmatprep.subr.bf16.mxu0 0
    %782 = vmatpush1.bf16.msra.mxu0 %v597
    %783 = vmatprep.subr.bf16.mxu0 0
    %784 = vmatpush1.bf16.msra.mxu0 %v596
    %785 = vmatprep.subr.bf16.mxu0 0
    %786 = vmatpush1.bf16.msra.mxu0 %v595
    %787 = vmatprep.subr.bf16.mxu0 0
    %788 = vmatpush2.bf16.msra.mxu0 %v610
    %789 = vmatprep.subr.bf16.mxu0 0
    %790 = vmatpush2.bf16.msra.mxu0 %v609
    %791 = vmatprep.subr.bf16.mxu0 0
    %792 = vmatpush2.bf16.msra.mxu0 %v608
    %793 = vmatprep.subr.bf16.mxu0 0
    %794 = vmatpush2.bf16.msra.mxu0 %v607
    %795 = vmatprep.subr.bf16.mxu0 0
    %796 = vmatpush2.bf16.msra.mxu0 %v606
    %797 = vmatprep.subr.bf16.mxu0 0
    %798 = vmatpush2.bf16.msra.mxu0 %v605
    %799 = vmatprep.subr.bf16.mxu0 0
    %800 = vmatpush2.bf16.msra.mxu0 %v604
    %801 = vmatprep.subr.bf16.mxu0 0
    %802 = vmatpush2.bf16.msra.mxu0 %v603
    %803 = vmatprep.mubr.bf16.mxu0 %v168
    %804 = vmatmul.mubr.bf16.gmra.mxu0 %v167
    %v805 = vpop.f32.mrf.mxu0
    %v806 = vadd.f32 %v766, %v805
    %v807 = vpop.f32.mrf.mxu0
    %v808 = vpop.f32.mrf.mxu0
    %v809 = vpop.f32.mrf.mxu0
    %810 = vdwg.mxu0
    %811 = vmatprep.subr.bf16.mxu0 0
    %812 = vmatpush1.bf16.msra.mxu0 %v618
    %813 = vmatprep.subr.bf16.mxu0 0
    %814 = vmatpush1.bf16.msra.mxu0 %v617
    %815 = vmatprep.subr.bf16.mxu0 0
    %816 = vmatpush1.bf16.msra.mxu0 %v616
    %817 = vmatprep.subr.bf16.mxu0 0
    %818 = vmatpush1.bf16.msra.mxu0 %v615
    %819 = vmatprep.subr.bf16.mxu0 0
    %820 = vmatpush1.bf16.msra.mxu0 %v614
    %821 = vmatprep.subr.bf16.mxu0 0
    %822 = vmatpush1.bf16.msra.mxu0 %v613
    %823 = vmatprep.subr.bf16.mxu0 0
    %824 = vmatpush1.bf16.msra.mxu0 %v612
    %825 = vmatprep.subr.bf16.mxu0 0
    %826 = vmatpush1.bf16.msra.mxu0 %v611
    %827 = vmatprep.subr.bf16.mxu0 0
    %828 = vmatpush2.bf16.msra.mxu0 %v626
    %829 = vmatprep.subr.bf16.mxu0 0
    %830 = vmatpush2.bf16.msra.mxu0 %v625
    %831 = vmatprep.subr.bf16.mxu0 0
    %832 = vmatpush2.bf16.msra.mxu0 %v624
    %833 = vmatprep.subr.bf16.mxu0 0
    %834 = vmatpush2.bf16.msra.mxu0 %v623
    %835 = vmatprep.subr.bf16.mxu0 0
    %836 = vmatpush2.bf16.msra.mxu0 %v622
    %837 = vmatprep.subr.bf16.mxu0 0
    %838 = vmatpush2.bf16.msra.mxu0 %v621
    %839 = vmatprep.subr.bf16.mxu0 0
    %840 = vmatpush2.bf16.msra.mxu0 %v620
    %841 = vmatprep.subr.bf16.mxu0 0
    %842 = vmatpush2.bf16.msra.mxu0 %v619
    %843 = vmatprep.mubr.bf16.mxu0 %v170
    %844 = vmatmul.mubr.bf16.gmra.mxu0 %v169
    %v845 = vpop.f32.mrf.mxu0
    %v846 = vadd.f32 %v806, %v845
    %v847 = vpop.f32.mrf.mxu0
    %v848 = vpop.f32.mrf.mxu0
    %v849 = vpop.f32.mrf.mxu0
    %850 = vdwg.mxu0
    %vm851 = vcmp.ge.f32.partialorder %v846, 0.0
    %v852 = vmul.f32 %v846, 0.2
    %v853 = vsel %vm851, %v846, %v852
    %v854 = vpack.c.bf16 %v853, %v853
    %v855 = vld [vmem:[#allocation8] sm:$0xff]
    %v856 = vld [vmem:[#allocation8 + $0x8] sm:$0xff]
    %v857 = vld [vmem:[#allocation8 + $0x10] sm:$0xff]
    %v858 = vld [vmem:[#allocation8 + $0x18] sm:$0xff]
    %v859 = vld [vmem:[#allocation8 + $0x20] sm:$0xff]
    %v860 = vld [vmem:[#allocation8 + $0x28] sm:$0xff]
    %v861 = vld [vmem:[#allocation8 + $0x30] sm:$0xff]
    %v862 = vld [vmem:[#allocation8 + $0x38] sm:$0xff]
    %v863 = vld [vmem:[#allocation8 + $0x40] sm:$0xff]
    %v864 = vld [vmem:[#allocation8 + $0x48] sm:$0xff]
    %v865 = vld [vmem:[#allocation8 + $0x50] sm:$0xff]
    %v866 = vld [vmem:[#allocation8 + $0x58] sm:$0xff]
    %v867 = vld [vmem:[#allocation8 + $0x60] sm:$0xff]
    %v868 = vld [vmem:[#allocation8 + $0x68] sm:$0xff]
    %v869 = vld [vmem:[#allocation8 + $0x70] sm:$0xff]
    %v870 = vld [vmem:[#allocation8 + $0x78] sm:$0xff]
    %v871 = vld [vmem:[%s5] sm:$0x3]
    %v873 = vlaneseq
    %v874 = vshrl.u32 %v873, 7
    %v875 = vsub.s32 0, %v874
    %v876 = vrot.slane %v871, %v875
    %v877 = vlaneseq
    %v878 = vshrl.u32 %v877, 7
    %v879 = vsub.s32 1, %v878
    %v880 = vrot.slane %v871, %v879
    %v899 = vunpack.c.l.b16 %v855
    %v900 = vunpack.c.h.b16 %v855
    %v901 = vunpack.c.l.b16 %v856
    %v902 = vunpack.c.h.b16 %v856
    %v903 = vunpack.c.l.b16 %v857
    %v904 = vunpack.c.h.b16 %v857
    %v905 = vunpack.c.l.b16 %v858
    %v906 = vunpack.c.h.b16 %v858
    %v907 = vunpack.c.l.b16 %v859
    %v908 = vunpack.c.h.b16 %v859
    %v909 = vunpack.c.l.b16 %v860
    %v910 = vunpack.c.h.b16 %v860
    %v911 = vunpack.c.l.b16 %v861
    %v912 = vunpack.c.h.b16 %v861
    %v913 = vunpack.c.l.b16 %v862
    %v914 = vunpack.c.h.b16 %v862
    %v915 = vunpack.c.l.b16 %v863
    %v916 = vunpack.c.h.b16 %v863
    %v917 = vunpack.c.l.b16 %v864
    %v918 = vunpack.c.h.b16 %v864
    %v919 = vunpack.c.l.b16 %v865
    %v920 = vunpack.c.h.b16 %v865
    %v921 = vunpack.c.l.b16 %v866
    %v922 = vunpack.c.h.b16 %v866
    %v923 = vunpack.c.l.b16 %v867
    %v924 = vunpack.c.h.b16 %v867
    %v925 = vunpack.c.l.b16 %v868
    %v926 = vunpack.c.h.b16 %v868
    %v927 = vunpack.c.l.b16 %v869
    %v928 = vunpack.c.h.b16 %v869
    %v929 = vunpack.c.l.b16 %v870
    %v930 = vunpack.c.h.b16 %v870
    %v931 = vpack.c.b16 %v901, %v899
    %v932 = vpack.c.b16 %v902, %v900
    %v933 = vpack.c.b16 %v905, %v903
    %v934 = vpack.c.b16 %v906, %v904
    %v935 = vpack.c.b16 %v909, %v907
    %v936 = vpack.c.b16 %v910, %v908
    %v937 = vpack.c.b16 %v913, %v911
    %v938 = vpack.c.b16 %v914, %v912
    %v939 = vpack.c.b16 %v917, %v915
    %v940 = vpack.c.b16 %v918, %v916
    %v941 = vpack.c.b16 %v921, %v919
    %v942 = vpack.c.b16 %v922, %v920
    %v943 = vpack.c.b16 %v925, %v923
    %v944 = vpack.c.b16 %v926, %v924
    %v945 = vpack.c.b16 %v929, %v927
    %v946 = vpack.c.b16 %v930, %v928
    %963 = vmatprep.subr.bf16.mxu0 %v946
    %964 = vmatpush1.bf16.msra.mxu0 %v945
    %965 = vmatprep.subr.bf16.mxu0 %v944
    %966 = vmatpush1.bf16.msra.mxu0 %v943
    %967 = vmatprep.subr.bf16.mxu0 %v942
    %968 = vmatpush1.bf16.msra.mxu0 %v941
    %969 = vmatprep.subr.bf16.mxu0 %v940
    %970 = vmatpush1.bf16.msra.mxu0 %v939
    %971 = vmatprep.subr.bf16.mxu0 %v938
    %972 = vmatpush1.bf16.msra.mxu0 %v937
    %973 = vmatprep.subr.bf16.mxu0 %v936
    %974 = vmatpush1.bf16.msra.mxu0 %v935
    %975 = vmatprep.subr.bf16.mxu0 %v934
    %976 = vmatpush1.bf16.msra.mxu0 %v933
    %977 = vmatprep.subr.bf16.mxu0 %v932
    %978 = vmatpush1.bf16.msra.mxu0 %v931
    %979 = vmatprep.subr.bf16.mxu0 0
    %980 = vmatpush2.bf16.msra.mxu0 0
    %981 = vmatprep.subr.bf16.mxu0 0
    %982 = vmatpush2.bf16.msra.mxu0 0
    %983 = vmatprep.subr.bf16.mxu0 0
    %984 = vmatpush2.bf16.msra.mxu0 0
    %985 = vmatprep.subr.bf16.mxu0 0
    %986 = vmatpush2.bf16.msra.mxu0 0
    %987 = vmatprep.subr.bf16.mxu0 0
    %988 = vmatpush2.bf16.msra.mxu0 0
    %989 = vmatprep.subr.bf16.mxu0 0
    %990 = vmatpush2.bf16.msra.mxu0 0
    %991 = vmatprep.subr.bf16.mxu0 0
    %992 = vmatpush2.bf16.msra.mxu0 0
    %993 = vmatprep.subr.bf16.mxu0 0
    %994 = vmatpush2.bf16.msra.mxu0 0
    %995 = vmatprep.mubr.bf16.mxu0 0
    %996 = vmatmul.mubr.bf16.gmra.mxu0 %v854
    %v997 = vpop.f32.mrf.mxu0
    %v998 = vadd.f32 %v876, %v997
    %v999 = vpop.f32.mrf.mxu0
    %v1000 = vadd.f32 %v880, %v999
    %v1001 = vpop.f32.mrf.mxu0
    %v1002 = vpop.f32.mrf.mxu0
    %1003 = vdwg.mxu0
    %v1004 = vmul.f32 %v1000, 0.5
    %v1005 = vmul.f32 %v1004, 1.442695
    %v1006 = vpow.pop %v1005
    %v1007 = vmul.f32 %v171, %v1006
    %v1008 = vadd.f32 %v998, %v1007
    %v1009 = vadd.f32 %v1000, 1.0
    %v1010 = vmul.f32 %v998, %v998
    %v1011 = vsub.f32 %v1009, %v1010
    %v1012 = vmul.f32 %v1006, %v1006
    %v1013 = vsub.f32 %v1011, %v1012
    %vm1014 = vcmask 1041408
    %v1015 = vsel %vm1014, %v1013, 0.0
    %1016 = vadd.xlane.f32.xlu0 %v1015
    %v1017 = vpop.xlane.xlu0 %1016
    %v1018 = vmul.f32 %v1017, -0.5
    %vm1019 = vcmask 1024
    %1020 = vst.msk [vmem:[%s11] sm:$0x3] %vm1019, %v1018
    %v1021 = vpack.c.bf16 %v1008, %v1008
    %v1022 = vld [vmem:[#allocation10] sm:$0xf]
    %v1023 = vld [vmem:[#allocation10 + $0x4] sm:$0xf]
    %v1024 = vld [vmem:[#allocation10 + $0x8] sm:$0xf]
    %v1025 = vld [vmem:[#allocation10 + $0xc] sm:$0xf]
    %v1026 = vld [vmem:[#allocation10 + $0x10] sm:$0xf]
    %v1027 = vld [vmem:[#allocation10 + $0x14] sm:$0xf]
    %v1028 = vld [vmem:[#allocation10 + $0x18] sm:$0xf]
    %v1029 = vld [vmem:[#allocation10 + $0x1c] sm:$0xf]
    %v1030 = vld [vmem:[#allocation10 + $0x20] sm:$0xf]
    %v1031 = vld [vmem:[#allocation10 + $0x24] sm:$0xf]
    %v1032 = vld [vmem:[#allocation10 + $0x28] sm:$0xf]
    %v1033 = vld [vmem:[#allocation10 + $0x2c] sm:$0xf]
    %v1034 = vld [vmem:[#allocation10 + $0x30] sm:$0xf]
    %v1035 = vld [vmem:[#allocation10 + $0x34] sm:$0xf]
    %v1036 = vld [vmem:[#allocation10 + $0x38] sm:$0xf]
    %v1037 = vld [vmem:[#allocation10 + $0x3c] sm:$0xf]
    %v1038 = vld [vmem:[%s7] sm:$0x1]
    %v1040 = vlaneseq
    %v1041 = vshrl.u32 %v1040, 7
    %v1042 = vsub.s32 0, %v1041
    %v1043 = vrot.slane %v1038, %v1042
    %v1061 = vunpack.c.l.b16 %v1022
    %v1062 = vunpack.c.l.b16 %v1023
    %v1063 = vunpack.c.l.b16 %v1024
    %v1064 = vunpack.c.l.b16 %v1025
    %v1065 = vunpack.c.l.b16 %v1026
    %v1066 = vunpack.c.l.b16 %v1027
    %v1067 = vunpack.c.l.b16 %v1028
    %v1068 = vunpack.c.l.b16 %v1029
    %v1069 = vunpack.c.l.b16 %v1030
    %v1070 = vunpack.c.l.b16 %v1031
    %v1071 = vunpack.c.l.b16 %v1032
    %v1072 = vunpack.c.l.b16 %v1033
    %v1073 = vunpack.c.l.b16 %v1034
    %v1074 = vunpack.c.l.b16 %v1035
    %v1075 = vunpack.c.l.b16 %v1036
    %v1076 = vunpack.c.l.b16 %v1037
    %v1077 = vpack.c.b16 %v1062, %v1061
    %v1078 = vpack.c.b16 %v1064, %v1063
    %v1079 = vpack.c.b16 %v1066, %v1065
    %v1080 = vpack.c.b16 %v1068, %v1067
    %v1081 = vpack.c.b16 %v1070, %v1069
    %v1082 = vpack.c.b16 %v1072, %v1071
    %v1083 = vpack.c.b16 %v1074, %v1073
    %v1084 = vpack.c.b16 %v1076, %v1075
    %1093 = vmatprep.subr.bf16.mxu0 0
    %1094 = vmatpush1.bf16.msra.mxu0 %v1084
    %1095 = vmatprep.subr.bf16.mxu0 0
    %1096 = vmatpush1.bf16.msra.mxu0 %v1083
    %1097 = vmatprep.subr.bf16.mxu0 0
    %1098 = vmatpush1.bf16.msra.mxu0 %v1082
    %1099 = vmatprep.subr.bf16.mxu0 0
    %1100 = vmatpush1.bf16.msra.mxu0 %v1081
    %1101 = vmatprep.subr.bf16.mxu0 0
    %1102 = vmatpush1.bf16.msra.mxu0 %v1080
    %1103 = vmatprep.subr.bf16.mxu0 0
    %1104 = vmatpush1.bf16.msra.mxu0 %v1079
    %1105 = vmatprep.subr.bf16.mxu0 0
    %1106 = vmatpush1.bf16.msra.mxu0 %v1078
    %1107 = vmatprep.subr.bf16.mxu0 0
    %1108 = vmatpush1.bf16.msra.mxu0 %v1077
    %1109 = vmatprep.subr.bf16.mxu0 0
    %1110 = vmatpush2.bf16.msra.mxu0 0
    %1111 = vmatprep.subr.bf16.mxu0 0
    %1112 = vmatpush2.bf16.msra.mxu0 0
    %1113 = vmatprep.subr.bf16.mxu0 0
    %1114 = vmatpush2.bf16.msra.mxu0 0
    %1115 = vmatprep.subr.bf16.mxu0 0
    %1116 = vmatpush2.bf16.msra.mxu0 0
    %1117 = vmatprep.subr.bf16.mxu0 0
    %1118 = vmatpush2.bf16.msra.mxu0 0
    %1119 = vmatprep.subr.bf16.mxu0 0
    %1120 = vmatpush2.bf16.msra.mxu0 0
    %1121 = vmatprep.subr.bf16.mxu0 0
    %1122 = vmatpush2.bf16.msra.mxu0 0
    %1123 = vmatprep.subr.bf16.mxu0 0
    %1124 = vmatpush2.bf16.msra.mxu0 0
    %1125 = vmatprep.mubr.bf16.mxu0 0
    %1126 = vmatmul.mubr.bf16.gmra.mxu0 %v1021
    %v1127 = vpop.f32.mrf.mxu0
    %v1128 = vadd.f32 %v1043, %v1127
    %v1129 = vpop.f32.mrf.mxu0
    %v1130 = vpop.f32.mrf.mxu0
    %v1131 = vpop.f32.mrf.mxu0
    %1132 = vdwg.mxu0
    %vm1133 = vcmp.ge.f32.partialorder %v1128, 0.0
    %v1134 = vmul.f32 %v1128, 0.2
    %v1135 = vsel %vm1133, %v1128, %v1134
    %v1136 = vpack.c.bf16 %v1135, %v1135
    %v1137 = vld [vmem:[#allocation11] sm:$0xff]
    %v1138 = vld [vmem:[#allocation11 + $0x8] sm:$0xff]
    %v1139 = vld [vmem:[#allocation11 + $0x10] sm:$0xff]
    %v1140 = vld [vmem:[#allocation11 + $0x18] sm:$0xff]
    %v1141 = vld [vmem:[#allocation11 + $0x20] sm:$0xff]
    %v1142 = vld [vmem:[#allocation11 + $0x28] sm:$0xff]
    %v1143 = vld [vmem:[#allocation11 + $0x30] sm:$0xff]
    %v1144 = vld [vmem:[#allocation11 + $0x38] sm:$0xff]
    %v1145 = vld [vmem:[#allocation11 + $0x40] sm:$0xff]
    %v1146 = vld [vmem:[#allocation11 + $0x48] sm:$0xff]
    %v1147 = vld [vmem:[#allocation11 + $0x50] sm:$0xff]
    %v1148 = vld [vmem:[#allocation11 + $0x58] sm:$0xff]
    %v1149 = vld [vmem:[#allocation11 + $0x60] sm:$0xff]
    %v1150 = vld [vmem:[#allocation11 + $0x68] sm:$0xff]
    %v1151 = vld [vmem:[#allocation11 + $0x70] sm:$0xff]
    %v1152 = vld [vmem:[#allocation11 + $0x78] sm:$0xff]
    %v1153 = vld [vmem:[#allocation11 + $0x80] sm:$0xff]
    %v1154 = vld [vmem:[#allocation11 + $0x88] sm:$0xff]
    %v1155 = vld [vmem:[#allocation11 + $0x90] sm:$0xff]
    %v1156 = vld [vmem:[#allocation11 + $0x98] sm:$0xff]
    %v1157 = vld [vmem:[#allocation11 + $0xa0] sm:$0xff]
    %v1158 = vld [vmem:[#allocation11 + $0xa8] sm:$0xff]
    %v1159 = vld [vmem:[#allocation11 + $0xb0] sm:$0xff]
    %v1160 = vld [vmem:[#allocation11 + $0xb8] sm:$0xff]
    %v1161 = vld [vmem:[#allocation11 + $0xc0] sm:$0xff]
    %v1162 = vld [vmem:[#allocation11 + $0xc8] sm:$0xff]
    %v1163 = vld [vmem:[#allocation11 + $0xd0] sm:$0xff]
    %v1164 = vld [vmem:[#allocation11 + $0xd8] sm:$0xff]
    %v1165 = vld [vmem:[#allocation11 + $0xe0] sm:$0xff]
    %v1166 = vld [vmem:[#allocation11 + $0xe8] sm:$0xff]
    %v1167 = vld [vmem:[#allocation11 + $0xf0] sm:$0xff]
    %v1168 = vld [vmem:[#allocation11 + $0xf8] sm:$0xff]
    %v1169 = vld [vmem:[#allocation11 + $0x100] sm:$0xff]
    %v1170 = vld [vmem:[#allocation11 + $0x108] sm:$0xff]
    %v1171 = vld [vmem:[#allocation11 + $0x110] sm:$0xff]
    %v1172 = vld [vmem:[#allocation11 + $0x118] sm:$0xff]
    %v1173 = vld [vmem:[#allocation11 + $0x120] sm:$0xff]
    %v1174 = vld [vmem:[#allocation11 + $0x128] sm:$0xff]
    %v1175 = vld [vmem:[#allocation11 + $0x130] sm:$0xff]
    %v1176 = vld [vmem:[#allocation11 + $0x138] sm:$0xff]
    %v1177 = vld [vmem:[#allocation11 + $0x140] sm:$0xff]
    %v1178 = vld [vmem:[#allocation11 + $0x148] sm:$0xff]
    %v1179 = vld [vmem:[#allocation11 + $0x150] sm:$0xff]
    %v1180 = vld [vmem:[#allocation11 + $0x158] sm:$0xff]
    %v1181 = vld [vmem:[#allocation11 + $0x160] sm:$0xff]
    %v1182 = vld [vmem:[#allocation11 + $0x168] sm:$0xff]
    %v1183 = vld [vmem:[#allocation11 + $0x170] sm:$0xff]
    %v1184 = vld [vmem:[#allocation11 + $0x178] sm:$0xff]
    %v1185 = vld [vmem:[#allocation11 + $0x180] sm:$0xff]
    %v1186 = vld [vmem:[#allocation11 + $0x188] sm:$0xff]
    %v1187 = vld [vmem:[#allocation11 + $0x190] sm:$0xff]
    %v1188 = vld [vmem:[#allocation11 + $0x198] sm:$0xff]
    %v1189 = vld [vmem:[#allocation11 + $0x1a0] sm:$0xff]
    %v1190 = vld [vmem:[#allocation11 + $0x1a8] sm:$0xff]
    %v1191 = vld [vmem:[#allocation11 + $0x1b0] sm:$0xff]
    %v1192 = vld [vmem:[#allocation11 + $0x1b8] sm:$0xff]
    %v1193 = vld [vmem:[#allocation11 + $0x1c0] sm:$0xff]
    %v1194 = vld [vmem:[#allocation11 + $0x1c8] sm:$0xff]
    %v1195 = vld [vmem:[#allocation11 + $0x1d0] sm:$0xff]
    %v1196 = vld [vmem:[#allocation11 + $0x1d8] sm:$0xff]
    %v1197 = vld [vmem:[#allocation11 + $0x1e0] sm:$0xff]
    %v1198 = vld [vmem:[#allocation11 + $0x1e8] sm:$0xff]
    %v1199 = vld [vmem:[#allocation11 + $0x1f0] sm:$0xff]
    %v1200 = vld [vmem:[#allocation11 + $0x1f8] sm:$0xff]
    %v1201 = vld [vmem:[%s9] sm:$0xff]
    %v1203 = vlaneseq
    %v1204 = vshrl.u32 %v1203, 7
    %v1205 = vsub.s32 0, %v1204
    %v1206 = vrot.slane %v1201, %v1205
    %v1207 = vlaneseq
    %v1208 = vshrl.u32 %v1207, 7
    %v1209 = vsub.s32 1, %v1208
    %v1210 = vrot.slane %v1201, %v1209
    %v1211 = vlaneseq
    %v1212 = vshrl.u32 %v1211, 7
    %v1213 = vsub.s32 2, %v1212
    %v1214 = vrot.slane %v1201, %v1213
    %v1215 = vlaneseq
    %v1216 = vshrl.u32 %v1215, 7
    %v1217 = vsub.s32 3, %v1216
    %v1218 = vrot.slane %v1201, %v1217
    %v1219 = vlaneseq
    %v1220 = vshrl.u32 %v1219, 7
    %v1221 = vsub.s32 4, %v1220
    %v1222 = vrot.slane %v1201, %v1221
    %v1223 = vlaneseq
    %v1224 = vshrl.u32 %v1223, 7
    %v1225 = vsub.s32 5, %v1224
    %v1226 = vrot.slane %v1201, %v1225
    %v1227 = vlaneseq
    %v1228 = vshrl.u32 %v1227, 7
    %v1229 = vsub.s32 6, %v1228
    %v1230 = vrot.slane %v1201, %v1229
    %v1231 = vlaneseq
    %v1232 = vshrl.u32 %v1231, 7
    %v1233 = vsub.s32 7, %v1232
    %v1234 = vrot.slane %v1201, %v1233
    %v1307 = vunpack.c.l.b16 %v1137
    %v1308 = vunpack.c.h.b16 %v1137
    %v1309 = vunpack.c.l.b16 %v1138
    %v1310 = vunpack.c.h.b16 %v1138
    %v1311 = vunpack.c.l.b16 %v1139
    %v1312 = vunpack.c.h.b16 %v1139
    %v1313 = vunpack.c.l.b16 %v1140
    %v1314 = vunpack.c.h.b16 %v1140
    %v1315 = vunpack.c.l.b16 %v1141
    %v1316 = vunpack.c.h.b16 %v1141
    %v1317 = vunpack.c.l.b16 %v1142
    %v1318 = vunpack.c.h.b16 %v1142
    %v1319 = vunpack.c.l.b16 %v1143
    %v1320 = vunpack.c.h.b16 %v1143
    %v1321 = vunpack.c.l.b16 %v1144
    %v1322 = vunpack.c.h.b16 %v1144
    %v1323 = vunpack.c.l.b16 %v1145
    %v1324 = vunpack.c.h.b16 %v1145
    %v1325 = vunpack.c.l.b16 %v1146
    %v1326 = vunpack.c.h.b16 %v1146
    %v1327 = vunpack.c.l.b16 %v1147
    %v1328 = vunpack.c.h.b16 %v1147
    %v1329 = vunpack.c.l.b16 %v1148
    %v1330 = vunpack.c.h.b16 %v1148
    %v1331 = vunpack.c.l.b16 %v1149
    %v1332 = vunpack.c.h.b16 %v1149
    %v1333 = vunpack.c.l.b16 %v1150
    %v1334 = vunpack.c.h.b16 %v1150
    %v1335 = vunpack.c.l.b16 %v1151
    %v1336 = vunpack.c.h.b16 %v1151
    %v1337 = vunpack.c.l.b16 %v1152
    %v1338 = vunpack.c.h.b16 %v1152
    %v1339 = vunpack.c.l.b16 %v1153
    %v1340 = vunpack.c.h.b16 %v1153
    %v1341 = vunpack.c.l.b16 %v1154
    %v1342 = vunpack.c.h.b16 %v1154
    %v1343 = vunpack.c.l.b16 %v1155
    %v1344 = vunpack.c.h.b16 %v1155
    %v1345 = vunpack.c.l.b16 %v1156
    %v1346 = vunpack.c.h.b16 %v1156
    %v1347 = vunpack.c.l.b16 %v1157
    %v1348 = vunpack.c.h.b16 %v1157
    %v1349 = vunpack.c.l.b16 %v1158
    %v1350 = vunpack.c.h.b16 %v1158
    %v1351 = vunpack.c.l.b16 %v1159
    %v1352 = vunpack.c.h.b16 %v1159
    %v1353 = vunpack.c.l.b16 %v1160
    %v1354 = vunpack.c.h.b16 %v1160
    %v1355 = vunpack.c.l.b16 %v1161
    %v1356 = vunpack.c.h.b16 %v1161
    %v1357 = vunpack.c.l.b16 %v1162
    %v1358 = vunpack.c.h.b16 %v1162
    %v1359 = vunpack.c.l.b16 %v1163
    %v1360 = vunpack.c.h.b16 %v1163
    %v1361 = vunpack.c.l.b16 %v1164
    %v1362 = vunpack.c.h.b16 %v1164
    %v1363 = vunpack.c.l.b16 %v1165
    %v1364 = vunpack.c.h.b16 %v1165
    %v1365 = vunpack.c.l.b16 %v1166
    %v1366 = vunpack.c.h.b16 %v1166
    %v1367 = vunpack.c.l.b16 %v1167
    %v1368 = vunpack.c.h.b16 %v1167
    %v1369 = vunpack.c.l.b16 %v1168
    %v1370 = vunpack.c.h.b16 %v1168
    %v1371 = vunpack.c.l.b16 %v1169
    %v1372 = vunpack.c.h.b16 %v1169
    %v1373 = vunpack.c.l.b16 %v1170
    %v1374 = vunpack.c.h.b16 %v1170
    %v1375 = vunpack.c.l.b16 %v1171
    %v1376 = vunpack.c.h.b16 %v1171
    %v1377 = vunpack.c.l.b16 %v1172
    %v1378 = vunpack.c.h.b16 %v1172
    %v1379 = vunpack.c.l.b16 %v1173
    %v1380 = vunpack.c.h.b16 %v1173
    %v1381 = vunpack.c.l.b16 %v1174
    %v1382 = vunpack.c.h.b16 %v1174
    %v1383 = vunpack.c.l.b16 %v1175
    %v1384 = vunpack.c.h.b16 %v1175
    %v1385 = vunpack.c.l.b16 %v1176
    %v1386 = vunpack.c.h.b16 %v1176
    %v1387 = vunpack.c.l.b16 %v1177
    %v1388 = vunpack.c.h.b16 %v1177
    %v1389 = vunpack.c.l.b16 %v1178
    %v1390 = vunpack.c.h.b16 %v1178
    %v1391 = vunpack.c.l.b16 %v1179
    %v1392 = vunpack.c.h.b16 %v1179
    %v1393 = vunpack.c.l.b16 %v1180
    %v1394 = vunpack.c.h.b16 %v1180
    %v1395 = vunpack.c.l.b16 %v1181
    %v1396 = vunpack.c.h.b16 %v1181
    %v1397 = vunpack.c.l.b16 %v1182
    %v1398 = vunpack.c.h.b16 %v1182
    %v1399 = vunpack.c.l.b16 %v1183
    %v1400 = vunpack.c.h.b16 %v1183
    %v1401 = vunpack.c.l.b16 %v1184
    %v1402 = vunpack.c.h.b16 %v1184
    %v1403 = vunpack.c.l.b16 %v1185
    %v1404 = vunpack.c.h.b16 %v1185
    %v1405 = vunpack.c.l.b16 %v1186
    %v1406 = vunpack.c.h.b16 %v1186
    %v1407 = vunpack.c.l.b16 %v1187
    %v1408 = vunpack.c.h.b16 %v1187
    %v1409 = vunpack.c.l.b16 %v1188
    %v1410 = vunpack.c.h.b16 %v1188
    %v1411 = vunpack.c.l.b16 %v1189
    %v1412 = vunpack.c.h.b16 %v1189
    %v1413 = vunpack.c.l.b16 %v1190
    %v1414 = vunpack.c.h.b16 %v1190
    %v1415 = vunpack.c.l.b16 %v1191
    %v1416 = vunpack.c.h.b16 %v1191
    %v1417 = vunpack.c.l.b16 %v1192
    %v1418 = vunpack.c.h.b16 %v1192
    %v1419 = vunpack.c.l.b16 %v1193
    %v1420 = vunpack.c.h.b16 %v1193
    %v1421 = vunpack.c.l.b16 %v1194
    %v1422 = vunpack.c.h.b16 %v1194
    %v1423 = vunpack.c.l.b16 %v1195
    %v1424 = vunpack.c.h.b16 %v1195
    %v1425 = vunpack.c.l.b16 %v1196
    %v1426 = vunpack.c.h.b16 %v1196
    %v1427 = vunpack.c.l.b16 %v1197
    %v1428 = vunpack.c.h.b16 %v1197
    %v1429 = vunpack.c.l.b16 %v1198
    %v1430 = vunpack.c.h.b16 %v1198
    %v1431 = vunpack.c.l.b16 %v1199
    %v1432 = vunpack.c.h.b16 %v1199
    %v1433 = vunpack.c.l.b16 %v1200
    %v1434 = vunpack.c.h.b16 %v1200
    %v1435 = vpack.c.b16 %v1315, %v1307
    %v1436 = vpack.c.b16 %v1316, %v1308
    %v1437 = vpack.c.b16 %v1317, %v1309
    %v1438 = vpack.c.b16 %v1318, %v1310
    %v1439 = vpack.c.b16 %v1319, %v1311
    %v1440 = vpack.c.b16 %v1320, %v1312
    %v1441 = vpack.c.b16 %v1321, %v1313
    %v1442 = vpack.c.b16 %v1322, %v1314
    %v1443 = vpack.c.b16 %v1331, %v1323
    %v1444 = vpack.c.b16 %v1332, %v1324
    %v1445 = vpack.c.b16 %v1333, %v1325
    %v1446 = vpack.c.b16 %v1334, %v1326
    %v1447 = vpack.c.b16 %v1335, %v1327
    %v1448 = vpack.c.b16 %v1336, %v1328
    %v1449 = vpack.c.b16 %v1337, %v1329
    %v1450 = vpack.c.b16 %v1338, %v1330
    %v1451 = vpack.c.b16 %v1347, %v1339
    %v1452 = vpack.c.b16 %v1348, %v1340
    %v1453 = vpack.c.b16 %v1349, %v1341
    %v1454 = vpack.c.b16 %v1350, %v1342
    %v1455 = vpack.c.b16 %v1351, %v1343
    %v1456 = vpack.c.b16 %v1352, %v1344
    %v1457 = vpack.c.b16 %v1353, %v1345
    %v1458 = vpack.c.b16 %v1354, %v1346
    %v1459 = vpack.c.b16 %v1363, %v1355
    %v1460 = vpack.c.b16 %v1364, %v1356
    %v1461 = vpack.c.b16 %v1365, %v1357
    %v1462 = vpack.c.b16 %v1366, %v1358
    %v1463 = vpack.c.b16 %v1367, %v1359
    %v1464 = vpack.c.b16 %v1368, %v1360
    %v1465 = vpack.c.b16 %v1369, %v1361
    %v1466 = vpack.c.b16 %v1370, %v1362
    %v1467 = vpack.c.b16 %v1379, %v1371
    %v1468 = vpack.c.b16 %v1380, %v1372
    %v1469 = vpack.c.b16 %v1381, %v1373
    %v1470 = vpack.c.b16 %v1382, %v1374
    %v1471 = vpack.c.b16 %v1383, %v1375
    %v1472 = vpack.c.b16 %v1384, %v1376
    %v1473 = vpack.c.b16 %v1385, %v1377
    %v1474 = vpack.c.b16 %v1386, %v1378
    %v1475 = vpack.c.b16 %v1395, %v1387
    %v1476 = vpack.c.b16 %v1396, %v1388
    %v1477 = vpack.c.b16 %v1397, %v1389
    %v1478 = vpack.c.b16 %v1398, %v1390
    %v1479 = vpack.c.b16 %v1399, %v1391
    %v1480 = vpack.c.b16 %v1400, %v1392
    %v1481 = vpack.c.b16 %v1401, %v1393
    %v1482 = vpack.c.b16 %v1402, %v1394
    %v1483 = vpack.c.b16 %v1411, %v1403
    %v1484 = vpack.c.b16 %v1412, %v1404
    %v1485 = vpack.c.b16 %v1413, %v1405
    %v1486 = vpack.c.b16 %v1414, %v1406
    %v1487 = vpack.c.b16 %v1415, %v1407
    %v1488 = vpack.c.b16 %v1416, %v1408
    %v1489 = vpack.c.b16 %v1417, %v1409
    %v1490 = vpack.c.b16 %v1418, %v1410
    %v1491 = vpack.c.b16 %v1427, %v1419
    %v1492 = vpack.c.b16 %v1428, %v1420
    %v1493 = vpack.c.b16 %v1429, %v1421
    %v1494 = vpack.c.b16 %v1430, %v1422
    %v1495 = vpack.c.b16 %v1431, %v1423
    %v1496 = vpack.c.b16 %v1432, %v1424
    %v1497 = vpack.c.b16 %v1433, %v1425
    %v1498 = vpack.c.b16 %v1434, %v1426
    %1563 = vmatprep.subr.bf16.mxu0 %v1492
    %1564 = vmatpush1.bf16.msra.mxu0 %v1491
    %1565 = vmatprep.subr.bf16.mxu0 %v1484
    %1566 = vmatpush1.bf16.msra.mxu0 %v1483
    %1567 = vmatprep.subr.bf16.mxu0 %v1476
    %1568 = vmatpush1.bf16.msra.mxu0 %v1475
    %1569 = vmatprep.subr.bf16.mxu0 %v1468
    %1570 = vmatpush1.bf16.msra.mxu0 %v1467
    %1571 = vmatprep.subr.bf16.mxu0 %v1460
    %1572 = vmatpush1.bf16.msra.mxu0 %v1459
    %1573 = vmatprep.subr.bf16.mxu0 %v1452
    %1574 = vmatpush1.bf16.msra.mxu0 %v1451
    %1575 = vmatprep.subr.bf16.mxu0 %v1444
    %1576 = vmatpush1.bf16.msra.mxu0 %v1443
    %1577 = vmatprep.subr.bf16.mxu0 %v1436
    %1578 = vmatpush1.bf16.msra.mxu0 %v1435
    %1579 = vmatprep.subr.bf16.mxu0 0
    %1580 = vmatpush2.bf16.msra.mxu0 0
    %1581 = vmatprep.subr.bf16.mxu0 0
    %1582 = vmatpush2.bf16.msra.mxu0 0
    %1583 = vmatprep.subr.bf16.mxu0 0
    %1584 = vmatpush2.bf16.msra.mxu0 0
    %1585 = vmatprep.subr.bf16.mxu0 0
    %1586 = vmatpush2.bf16.msra.mxu0 0
    %1587 = vmatprep.subr.bf16.mxu0 0
    %1588 = vmatpush2.bf16.msra.mxu0 0
    %1589 = vmatprep.subr.bf16.mxu0 0
    %1590 = vmatpush2.bf16.msra.mxu0 0
    %1591 = vmatprep.subr.bf16.mxu0 0
    %1592 = vmatpush2.bf16.msra.mxu0 0
    %1593 = vmatprep.subr.bf16.mxu0 0
    %1594 = vmatpush2.bf16.msra.mxu0 0
    %1595 = vmatprep.mubr.bf16.mxu0 0
    %1596 = vmatmul.mubr.bf16.gmra.mxu0 %v1136
    %v1597 = vpop.f32.mrf.mxu0
    %v1598 = vadd.f32 %v1206, %v1597
    %v1599 = vpop.f32.mrf.mxu0
    %v1600 = vadd.f32 %v1210, %v1599
    %v1601 = vpop.f32.mrf.mxu0
    %v1602 = vpop.f32.mrf.mxu0
    %1603 = vdwg.mxu0
    %1604 = vmatprep.subr.bf16.mxu0 %v1494
    %1605 = vmatpush1.bf16.msra.mxu0 %v1493
    %1606 = vmatprep.subr.bf16.mxu0 %v1486
    %1607 = vmatpush1.bf16.msra.mxu0 %v1485
    %1608 = vmatprep.subr.bf16.mxu0 %v1478
    %1609 = vmatpush1.bf16.msra.mxu0 %v1477
    %1610 = vmatprep.subr.bf16.mxu0 %v1470
    %1611 = vmatpush1.bf16.msra.mxu0 %v1469
    %1612 = vmatprep.subr.bf16.mxu0 %v1462
    %1613 = vmatpush1.bf16.msra.mxu0 %v1461
    %1614 = vmatprep.subr.bf16.mxu0 %v1454
    %1615 = vmatpush1.bf16.msra.mxu0 %v1453
    %1616 = vmatprep.subr.bf16.mxu0 %v1446
    %1617 = vmatpush1.bf16.msra.mxu0 %v1445
    %1618 = vmatprep.subr.bf16.mxu0 %v1438
    %1619 = vmatpush1.bf16.msra.mxu0 %v1437
    %1620 = vmatprep.subr.bf16.mxu0 0
    %1621 = vmatpush2.bf16.msra.mxu0 0
    %1622 = vmatprep.subr.bf16.mxu0 0
    %1623 = vmatpush2.bf16.msra.mxu0 0
    %1624 = vmatprep.subr.bf16.mxu0 0
    %1625 = vmatpush2.bf16.msra.mxu0 0
    %1626 = vmatprep.subr.bf16.mxu0 0
    %1627 = vmatpush2.bf16.msra.mxu0 0
    %1628 = vmatprep.subr.bf16.mxu0 0
    %1629 = vmatpush2.bf16.msra.mxu0 0
    %1630 = vmatprep.subr.bf16.mxu0 0
    %1631 = vmatpush2.bf16.msra.mxu0 0
    %1632 = vmatprep.subr.bf16.mxu0 0
    %1633 = vmatpush2.bf16.msra.mxu0 0
    %1634 = vmatprep.subr.bf16.mxu0 0
    %1635 = vmatpush2.bf16.msra.mxu0 0
    %1636 = vmatprep.mubr.bf16.mxu0 0
    %1637 = vmatmul.mubr.bf16.gmra.mxu0 %v1136
    %v1638 = vpop.f32.mrf.mxu0
    %v1639 = vadd.f32 %v1214, %v1638
    %v1640 = vpop.f32.mrf.mxu0
    %v1641 = vadd.f32 %v1218, %v1640
    %v1642 = vpop.f32.mrf.mxu0
    %v1643 = vpop.f32.mrf.mxu0
    %1644 = vdwg.mxu0
    %1645 = vmatprep.subr.bf16.mxu0 %v1496
    %1646 = vmatpush1.bf16.msra.mxu0 %v1495
    %1647 = vmatprep.subr.bf16.mxu0 %v1488
    %1648 = vmatpush1.bf16.msra.mxu0 %v1487
    %1649 = vmatprep.subr.bf16.mxu0 %v1480
    %1650 = vmatpush1.bf16.msra.mxu0 %v1479
    %1651 = vmatprep.subr.bf16.mxu0 %v1472
    %1652 = vmatpush1.bf16.msra.mxu0 %v1471
    %1653 = vmatprep.subr.bf16.mxu0 %v1464
    %1654 = vmatpush1.bf16.msra.mxu0 %v1463
    %1655 = vmatprep.subr.bf16.mxu0 %v1456
    %1656 = vmatpush1.bf16.msra.mxu0 %v1455
    %1657 = vmatprep.subr.bf16.mxu0 %v1448
    %1658 = vmatpush1.bf16.msra.mxu0 %v1447
    %1659 = vmatprep.subr.bf16.mxu0 %v1440
    %1660 = vmatpush1.bf16.msra.mxu0 %v1439
    %1661 = vmatprep.subr.bf16.mxu0 0
    %1662 = vmatpush2.bf16.msra.mxu0 0
    %1663 = vmatprep.subr.bf16.mxu0 0
    %1664 = vmatpush2.bf16.msra.mxu0 0
    %1665 = vmatprep.subr.bf16.mxu0 0
    %1666 = vmatpush2.bf16.msra.mxu0 0
    %1667 = vmatprep.subr.bf16.mxu0 0
    %1668 = vmatpush2.bf16.msra.mxu0 0
    %1669 = vmatprep.subr.bf16.mxu0 0
    %1670 = vmatpush2.bf16.msra.mxu0 0
    %1671 = vmatprep.subr.bf16.mxu0 0
    %1672 = vmatpush2.bf16.msra.mxu0 0
    %1673 = vmatprep.subr.bf16.mxu0 0
    %1674 = vmatpush2.bf16.msra.mxu0 0
    %1675 = vmatprep.subr.bf16.mxu0 0
    %1676 = vmatpush2.bf16.msra.mxu0 0
    %1677 = vmatprep.mubr.bf16.mxu0 0
    %1678 = vmatmul.mubr.bf16.gmra.mxu0 %v1136
    %v1679 = vpop.f32.mrf.mxu0
    %v1680 = vadd.f32 %v1222, %v1679
    %v1681 = vpop.f32.mrf.mxu0
    %v1682 = vadd.f32 %v1226, %v1681
    %v1683 = vpop.f32.mrf.mxu0
    %v1684 = vpop.f32.mrf.mxu0
    %1685 = vdwg.mxu0
    %1686 = vmatprep.subr.bf16.mxu0 %v1498
    %1687 = vmatpush1.bf16.msra.mxu0 %v1497
    %1688 = vmatprep.subr.bf16.mxu0 %v1490
    %1689 = vmatpush1.bf16.msra.mxu0 %v1489
    %1690 = vmatprep.subr.bf16.mxu0 %v1482
    %1691 = vmatpush1.bf16.msra.mxu0 %v1481
    %1692 = vmatprep.subr.bf16.mxu0 %v1474
    %1693 = vmatpush1.bf16.msra.mxu0 %v1473
    %1694 = vmatprep.subr.bf16.mxu0 %v1466
    %1695 = vmatpush1.bf16.msra.mxu0 %v1465
    %1696 = vmatprep.subr.bf16.mxu0 %v1458
    %1697 = vmatpush1.bf16.msra.mxu0 %v1457
    %1698 = vmatprep.subr.bf16.mxu0 %v1450
    %1699 = vmatpush1.bf16.msra.mxu0 %v1449
    %1700 = vmatprep.subr.bf16.mxu0 %v1442
    %1701 = vmatpush1.bf16.msra.mxu0 %v1441
    %1702 = vmatprep.subr.bf16.mxu0 0
    %1703 = vmatpush2.bf16.msra.mxu0 0
    %1704 = vmatprep.subr.bf16.mxu0 0
    %1705 = vmatpush2.bf16.msra.mxu0 0
    %1706 = vmatprep.subr.bf16.mxu0 0
    %1707 = vmatpush2.bf16.msra.mxu0 0
    %1708 = vmatprep.subr.bf16.mxu0 0
    %1709 = vmatpush2.bf16.msra.mxu0 0
    %1710 = vmatprep.subr.bf16.mxu0 0
    %1711 = vmatpush2.bf16.msra.mxu0 0
    %1712 = vmatprep.subr.bf16.mxu0 0
    %1713 = vmatpush2.bf16.msra.mxu0 0
    %1714 = vmatprep.subr.bf16.mxu0 0
    %1715 = vmatpush2.bf16.msra.mxu0 0
    %1716 = vmatprep.subr.bf16.mxu0 0
    %1717 = vmatpush2.bf16.msra.mxu0 0
    %1718 = vmatprep.mubr.bf16.mxu0 0
    %1719 = vmatmul.mubr.bf16.gmra.mxu0 %v1136
    %v1720 = vpop.f32.mrf.mxu0
    %v1721 = vadd.f32 %v1230, %v1720
    %v1722 = vpop.f32.mrf.mxu0
    %v1723 = vadd.f32 %v1234, %v1722
    %v1724 = vpop.f32.mrf.mxu0
    %v1725 = vpop.f32.mrf.mxu0
    %1726 = vdwg.mxu0
    %v1727 = vtanh.pop %v1598
    %v1728 = vtanh.pop %v1600
    %v1729 = vtanh.pop %v1639
    %v1730 = vtanh.pop %v1641
    %v1731 = vtanh.pop %v1680
    %v1732 = vtanh.pop %v1682
    %v1733 = vtanh.pop %v1721
    %v1734 = vtanh.pop %v1723
    %v1743 = vcombine.low %v1727, %v1728
    %v1744 = vcombine.low %v1729, %v1730
    %v1746 = vunpack.c.l.s4 1983009808
    %v1747 = vunpack.c.0.s8 %v1746
    %v1748 = vlaneseq
    %v1749 = vshrl.u32 %v1748, 7
    %v1750 = vsub.s32 %v1747, %v1749
    %v1751 = vrot.slane %v1743, %v1750
    %v1753 = vunpack.c.l.s4 1983009808
    %v1754 = vunpack.c.0.s8 %v1753
    %v1755 = vlaneseq
    %v1756 = vshrl.u32 %v1755, 7
    %v1757 = vsub.s32 %v1754, %v1756
    %v1758 = vrot.slane %v1744, %v1757
    %v1759 = vcombine.low %v1751, %v1758
    %v1760 = vcombine.low %v1731, %v1732
    %v1761 = vcombine.low %v1733, %v1734
    %v1763 = vunpack.c.l.s4 1983009808
    %v1764 = vunpack.c.0.s8 %v1763
    %v1765 = vlaneseq
    %v1766 = vshrl.u32 %v1765, 7
    %v1767 = vsub.s32 %v1764, %v1766
    %v1768 = vrot.slane %v1760, %v1767
    %v1770 = vunpack.c.l.s4 1983009808
    %v1771 = vunpack.c.0.s8 %v1770
    %v1772 = vlaneseq
    %v1773 = vshrl.u32 %v1772, 7
    %v1774 = vsub.s32 %v1771, %v1773
    %v1775 = vrot.slane %v1761, %v1774
    %v1776 = vcombine.low %v1768, %v1775
    %1779 = vst [vmem:[#allocation13] sm:$0xff] %v1759
    %1780 = vst [vmem:[#allocation13 + $0x8] sm:$0xff] %v1776
    // Predicated region
    $region66: #{tpu_custom_call.1} parent=1 // pred_check
      _
    $region67: #{tpu_custom_call.1} parent=1 // pred_check_branch
      %1782 = sbr.rel (0) target = $region69
    $region68: #{tpu_custom_call.1} parent=1 // pred_region
      %s1784 = ssub.s32 256, 256
      %1785 = vsyncadd [#allocation4], %s1784
      %s1787 = sshll.u32 [#allocation13], 4
      %s1788 = int_to_ptr.vmem [resolvable:$true] %s1787
      %1790 = dma.vmem_to_hbm [thread:$0]  %s1788, 256, %s10, [#allocation4]
    $region69: #{tpu_custom_call.1} parent=1 // pred_fallthru
      _
    // Predicated region
    $region70: #{tpu_custom_call.1} parent=1 // pred_check
      _
    $region71: #{tpu_custom_call.1} parent=1 // pred_check_branch
      %1792 = sbr.rel (0) target = $region73
    $region72: #{tpu_custom_call.1} parent=1 // pred_region
      _
    $region73: #{tpu_custom_call.1} parent=1 // pred_fallthru
      _
    // Predicated region
    $region74: #{tpu_custom_call.1} parent=1 // pred_check
      _
    $region75: #{tpu_custom_call.1} parent=1 // pred_check_branch
      %1794 = sbr.rel (0) target = $region77
    $region76: #{tpu_custom_call.1} parent=1 // pred_region
      %1795 = dma.done [#allocation4], 256
    $region77: #{tpu_custom_call.1} parent=1 // pred_fallthru
      _
    // Predicated region
    $region78: #{tpu_custom_call.1} parent=1 // pred_check
      _
    $region79: #{tpu_custom_call.1} parent=1 // pred_check_branch
      %1797 = sbr.rel (0) target = $region81
    $region80: #{tpu_custom_call.1} parent=1 // pred_region
      _
    $region81: #{tpu_custom_call.1} parent=1 // pred_fallthru
      _
    %1798 = vsyncpa [#allocation3], 1
    %1799 = vsyncpa [#allocation6], 1
    %1800 = vsyncpa [#allocation9], 1
    %1801 = vsyncpa [#allocation12], 1
    %1802 = vsyncpa [#allocation4], 1

</llo_original>
